<compile_context>
chip_gen: v6e
topology: v6e:2x2x1
jax: 0.10.0
libtpu: 0.0.40
codegen_flags: <defaults>
</compile_context>

<pallas_src>
import functools
import math

import jax
import jax.numpy as jnp
from jax.experimental import pallas as pl
from jax.experimental.pallas import tpu as pltpu


# ---------------------------------------------------------------------------
# Fused per-batch-element kernel: transformer block + classifier + CE partials
# ---------------------------------------------------------------------------
def _layernorm(x):
    # LayerNorm without affine params (synthetic model), f32.
    mu = jnp.mean(x, axis=-1, keepdims=True)
    var = jnp.mean((x - mu) * (x - mu), axis=-1, keepdims=True)
    return (x - mu) * jax.lax.rsqrt(var + 1e-5)


def model_kernel(x_ref, mask_ref, labels_ref,
                 wq_ref, wk_ref, wv_ref, wo_ref,
                 w1_ref, w2_ref, wc_ref, bc_ref,
                 logits_ref, loss_ref, *, num_labels):
    x_lo = x_ref[0]                         # (S, H) bf16 (MXU operand)
    x = x_lo.astype(jnp.float32)            # f32 for residual / layernorm
    mask = mask_ref[0]                      # (1, S) f32, 1.0 = attend
    labels = labels_ref[0]                  # (S, 1) i32

    H = x.shape[-1]
    scale = 1.0 / math.sqrt(H)

    # --- self-attention (single head, head_dim == H), bf16 in / f32 acc ---
    q = jnp.dot(x_lo, wq_ref[...], preferred_element_type=jnp.float32)
    k = jnp.dot(x_lo, wk_ref[...], preferred_element_type=jnp.float32)
    v = jnp.dot(x_lo, wv_ref[...], preferred_element_type=jnp.float32)

    # Contract over H directly: no k.T materialization / XLU transpose.
    scores = jax.lax.dot_general(
        q.astype(jnp.bfloat16), k.astype(jnp.bfloat16),
        dimension_numbers=(((1,), (1,)), ((), ())),
        preferred_element_type=jnp.float32) * scale          # (S, S) f32

    # Key-padding mask: single VPU select in f32 (no 1e9 bias arithmetic).
    scores = jnp.where(mask > 0.0, scores, -1e30)

    m = jnp.max(scores, axis=-1, keepdims=True)
    p = jnp.exp(scores - m)
    p = p * pl.reciprocal(jnp.sum(p, axis=-1, keepdims=True), approx=True)

    attn = jnp.dot(p.astype(jnp.bfloat16), v.astype(jnp.bfloat16),
                   preferred_element_type=jnp.float32)       # (S, H) f32
    attn = jnp.dot(attn.astype(jnp.bfloat16), wo_ref[...],
                   preferred_element_type=jnp.float32)
    h = _layernorm(x + attn)

    # --- feed-forward ---
    ff = jnp.maximum(jnp.dot(h.astype(jnp.bfloat16), w1_ref[...],
                             preferred_element_type=jnp.float32), 0.0)
    ff = jnp.dot(ff.astype(jnp.bfloat16), w2_ref[...],
                 preferred_element_type=jnp.float32)
    h = _layernorm(h + ff)

    # --- token classification head (class dim padded to 128 lanes) ---
    logits = jnp.dot(h.astype(jnp.bfloat16), wc_ref[...],
                     preferred_element_type=jnp.float32) + bc_ref[...]  # (S, Lp)
    logits_ref[0] = logits                  # lane-dense f32 store

    # --- fused cross-entropy partials (ignore_index = -100, in f32) ---
    Lp = logits.shape[-1]
    cls = jax.lax.broadcasted_iota(jnp.int32, logits.shape, 1)          # (S, Lp)
    logits_m = jnp.where(cls < num_labels, logits, -1e30)   # hide padded classes
    mx = jnp.max(logits_m, axis=-1, keepdims=True)
    lse = mx + jnp.log(jnp.sum(jnp.exp(logits_m - mx), axis=-1, keepdims=True))
    onehot = (cls == labels).astype(jnp.float32)             # labels in 0..L-1
    picked = jnp.sum(logits * onehot, axis=-1, keepdims=True)
    valid = (labels != -100).astype(jnp.float32)
    total = jnp.sum((lse - picked) * valid)
    count = jnp.sum(valid)

    lane = jax.lax.broadcasted_iota(jnp.int32, (1, Lp), 1)
    loss_ref[0] = jnp.where(lane == 0, total,
                            jnp.where(lane == 1, count, jnp.float32(0.0)))


def run_model(x_emb, attn_mask, labels3d, params, num_labels):
    """x_emb: [B,S,H] bf16, attn_mask: [B,1,S] f32, labels3d: [B,S,1] i32
    -> (padded logits [B,S,Lp] f32, CE partials [B,1,Lp] f32)."""
    B, S, H = x_emb.shape
    Lp = params["wc"].shape[-1]
    F = params["w1"].shape[-1]

    w2d = lambda shape: pl.BlockSpec(shape, lambda b: (0, 0))
    kernel = functools.partial(model_kernel, num_labels=num_labels)

    return pl.pallas_call(
        kernel,
        out_shape=(jax.ShapeDtypeStruct((B, S, Lp), jnp.float32),
                   jax.ShapeDtypeStruct((B, 1, Lp), jnp.float32)),
        grid=(B,),
        in_specs=[
            pl.BlockSpec((1, S, H), lambda b: (b, 0, 0)),    # x (bf16)
            pl.BlockSpec((1, 1, S), lambda b: (b, 0, 0)),    # attention mask (f32)
            pl.BlockSpec((1, S, 1), lambda b: (b, 0, 0)),    # labels (i32, sublanes)
            w2d((H, H)), w2d((H, H)), w2d((H, H)), w2d((H, H)),   # wq wk wv wo
            w2d((H, F)), w2d((F, H)),                              # w1 w2
            w2d((H, Lp)), w2d((1, Lp)),                            # wc bc
        ],
        out_specs=(
            pl.BlockSpec((1, S, Lp), lambda b: (b, 0, 0)),   # logits (lane-dense)
            pl.BlockSpec((1, 1, Lp), lambda b: (b, 0, 0)),   # per-batch CE partials
        ),
        compiler_params=pltpu.CompilerParams(
            dimension_semantics=("parallel",)),
    )(x_emb, attn_mask, labels3d,
      params["wq"], params["wk"], params["wv"], params["wo"],
      params["w1"], params["w2"], params["wc"], params["bc"])


# ---------------------------------------------------------------------------
# Parameter init (synthetic XLNet-like block), bf16 weights / f32 bias
# ---------------------------------------------------------------------------
def init_params(key, vocab, H, F, L, Lp):
    ks = jax.random.split(key, 9)
    s = 0.05
    bf = lambda k, shape: (jax.random.normal(k, shape, jnp.float32) * s
                           ).astype(jnp.bfloat16)
    wc = jnp.zeros((H, Lp), jnp.float32)
    wc = wc.at[:, :L].set(jax.random.normal(ks[7], (H, L), jnp.float32) * s)
    bc = jnp.zeros((1, Lp), jnp.float32)
    bc = bc.at[:, :L].set(jax.random.normal(ks[8], (1, L), jnp.float32) * s)
    return {
        "emb": bf(ks[0], (vocab, H)),
        "wq": bf(ks[1], (H, H)),
        "wk": bf(ks[2], (H, H)),
        "wv": bf(ks[3], (H, H)),
        "wo": bf(ks[4], (H, H)),
        "w1": bf(ks[5], (H, F)),
        "w2": bf(ks[6], (F, H)),
        "wc": wc.astype(jnp.bfloat16),
        "bc": bc,                      # bias stays f32
    }


# ---------------------------------------------------------------------------
# XLNetClassifier.forward equivalent
# ---------------------------------------------------------------------------
@functools.partial(jax.jit, static_argnames=("num_labels",))
def xlnet_classifier_forward(params, input_ids, attention_mask, labels=None,
                             *, num_labels=4):
    B, S = input_ids.shape
    # Embedding lookup (glue, plain JAX).
    x = jnp.take(params["emb"], input_ids, axis=0)           # [B, S, H] bf16
    mask = attention_mask.astype(jnp.float32)[:, None, :]    # [B, 1, S]

    if labels is None:
        lab = jnp.zeros((B, S, 1), jnp.int32)                # dummy, CE ignored
    else:
        lab = labels.reshape(B, S, 1).astype(jnp.int32)

    logits_pad, partials = run_model(x, mask, lab, params, num_labels)
    logits = logits_pad[:, :, :num_labels]                   # [B, S, L]

    if labels is not None:
        total = jnp.sum(partials[:, 0, 0])
        count = jnp.sum(partials[:, 0, 1])
        # Matches torch: NaN if every label is -100.
        loss = total / count
        return loss, logits
    return logits


if __name__ == "__main__":
    B, S, H, F, L, Lp, VOCAB = 2, 8, 128, 256, 4, 128, 50

    key = jax.random.PRNGKey(0)
    kp, ki, km, kl = jax.random.split(key, 4)

    params = init_params(kp, VOCAB, H, F, L, Lp)

    input_ids = jax.random.randint(ki, (B, S), 0, VOCAB, dtype=jnp.int32)
    attention_mask = jnp.ones((B, S), dtype=jnp.int32)
    attention_mask = attention_mask.at[1, S - 2:].set(0)      # pad last 2 tokens row 1

    labels = jax.random.randint(kl, (B, S), 0, L, dtype=jnp.int32)
    labels = labels.at[1, S - 2:].set(-100)                   # ignored positions

    # forward with labels -> (loss, logits), mimicking XLNetClassifier.forward
    loss, logits = xlnet_classifier_forward(params, input_ids, attention_mask,
                                            labels, num_labels=L)
    jax.block_until_ready((loss, logits))

    # forward without labels -> logits only
    logits_only = xlnet_classifier_forward(params, input_ids, attention_mask,
                                           None, num_labels=L)
    jax.block_until_ready(logits_only)

    assert logits.shape == (B, S, L)
    assert logits_only.shape == (B, S, L)
    assert bool(jnp.isfinite(loss))

    print("KERNEL_OK")
</pallas_src>

<mosaic_0001>
module attributes {stable_mosaic.version = 11 : i64} {
  func.func @model_kernel(%arg0: i32, %arg1: memref<1x8x128xbf16, #tpu.memory_space<vmem>>, %arg2: memref<1x1x8xf32, #tpu.memory_space<vmem>>, %arg3: memref<1x8x1xi32, #tpu.memory_space<vmem>>, %arg4: memref<128x128xbf16, #tpu.memory_space<vmem>>, %arg5: memref<128x128xbf16, #tpu.memory_space<vmem>>, %arg6: memref<128x128xbf16, #tpu.memory_space<vmem>>, %arg7: memref<128x128xbf16, #tpu.memory_space<vmem>>, %arg8: memref<128x256xbf16, #tpu.memory_space<vmem>>, %arg9: memref<256x128xbf16, #tpu.memory_space<vmem>>, %arg10: memref<128x128xbf16, #tpu.memory_space<vmem>>, %arg11: memref<1x128xf32, #tpu.memory_space<vmem>>, %arg12: memref<1x8x128xf32, #tpu.memory_space<vmem>>, %arg13: memref<1x1x128xf32, #tpu.memory_space<vmem>>) attributes {dimension_semantics = [#tpu.dimension_semantics<parallel>], iteration_bounds = array<i64: 2>, scalar_prefetch = 0 : i64, scratch_operands = 0 : i64, tpu.core_type = #tpu.core_type<tc>, window_params = [{transform_indices = @transform_0, window_bounds = array<i64: 1, 8, 128>}, {transform_indices = @transform_1, window_bounds = array<i64: 1, 1, 8>}, {transform_indices = @transform_2, window_bounds = array<i64: 1, 8, 1>}, {pipeline_mode = #tpu.pipeline_mode<synchronous>, transform_indices = @transform_3, window_bounds = array<i64: 128, 128>}, {pipeline_mode = #tpu.pipeline_mode<synchronous>, transform_indices = @transform_4, window_bounds = array<i64: 128, 128>}, {pipeline_mode = #tpu.pipeline_mode<synchronous>, transform_indices = @transform_5, window_bounds = array<i64: 128, 128>}, {pipeline_mode = #tpu.pipeline_mode<synchronous>, transform_indices = @transform_6, window_bounds = array<i64: 128, 128>}, {pipeline_mode = #tpu.pipeline_mode<synchronous>, transform_indices = @transform_7, window_bounds = array<i64: 128, 256>}, {pipeline_mode = #tpu.pipeline_mode<synchronous>, transform_indices = @transform_8, window_bounds = array<i64: 256, 128>}, {pipeline_mode = #tpu.pipeline_mode<synchronous>, transform_indices = @transform_9, window_bounds = array<i64: 128, 128>}, {pipeline_mode = #tpu.pipeline_mode<synchronous>, transform_indices = @transform_10, window_bounds = array<i64: 1, 128>}, {transform_indices = @transform_11, window_bounds = array<i64: 1, 8, 128>}, {transform_indices = @transform_12, window_bounds = array<i64: 1, 1, 128>}]} {
    %c0 = arith.constant 0 : index
    %c0_0 = arith.constant 0 : index
    %c0_1 = arith.constant 0 : index
    %0 = vector.load %arg1[%c0, %c0_0, %c0_1] : memref<1x8x128xbf16, #tpu.memory_space<vmem>>, vector<1x8x128xbf16>
    %1 = vector.shape_cast %0 : vector<1x8x128xbf16> to vector<8x128xbf16>
    %2 = arith.extf %1 : vector<8x128xbf16> to vector<8x128xf32>
    %c0_2 = arith.constant 0 : index
    %c0_3 = arith.constant 0 : index
    %c0_4 = arith.constant 0 : index
    %3 = vector.load %arg2[%c0_2, %c0_3, %c0_4] : memref<1x1x8xf32, #tpu.memory_space<vmem>>, vector<1x1x8xf32>
    %4 = vector.shape_cast %3 : vector<1x1x8xf32> to vector<1x8xf32>
    %c0_5 = arith.constant 0 : index
    %c0_6 = arith.constant 0 : index
    %c0_7 = arith.constant 0 : index
    %5 = vector.load %arg3[%c0_5, %c0_6, %c0_7] : memref<1x8x1xi32, #tpu.memory_space<vmem>>, vector<1x8x1xi32>
    %6 = vector.shape_cast %5 : vector<1x8x1xi32> to vector<8x1xi32>
    %c0_8 = arith.constant 0 : index
    %c0_9 = arith.constant 0 : index
    %7 = vector.load %arg4[%c0_8, %c0_9] : memref<128x128xbf16, #tpu.memory_space<vmem>>, vector<128x128xbf16>
    %cst = arith.constant dense<0.000000e+00> : vector<8x128xf32>
    %8 = tpu.matmul %1, %7, %cst {dimension_numbers = #tpu.dot_dimension_numbers<[1], [0], [0], [1], [0, 0, 1, 1], [], []>} : vector<8x128xbf16>, vector<128x128xbf16>, vector<8x128xf32> -> vector<8x128xf32>
    %c0_10 = arith.constant 0 : index
    %c0_11 = arith.constant 0 : index
    %9 = vector.load %arg5[%c0_10, %c0_11] : memref<128x128xbf16, #tpu.memory_space<vmem>>, vector<128x128xbf16>
    %cst_12 = arith.constant dense<0.000000e+00> : vector<8x128xf32>
    %10 = tpu.matmul %1, %9, %cst_12 {dimension_numbers = #tpu.dot_dimension_numbers<[1], [0], [0], [1], [0, 0, 1, 1], [], []>} : vector<8x128xbf16>, vector<128x128xbf16>, vector<8x128xf32> -> vector<8x128xf32>
    %c0_13 = arith.constant 0 : index
    %c0_14 = arith.constant 0 : index
    %11 = vector.load %arg6[%c0_13, %c0_14] : memref<128x128xbf16, #tpu.memory_space<vmem>>, vector<128x128xbf16>
    %cst_15 = arith.constant dense<0.000000e+00> : vector<8x128xf32>
    %12 = tpu.matmul %1, %11, %cst_15 {dimension_numbers = #tpu.dot_dimension_numbers<[1], [0], [0], [1], [0, 0, 1, 1], [], []>} : vector<8x128xbf16>, vector<128x128xbf16>, vector<8x128xf32> -> vector<8x128xf32>
    %13 = arith.truncf %8 : vector<8x128xf32> to vector<8x128xbf16>
    %14 = arith.truncf %10 : vector<8x128xf32> to vector<8x128xbf16>
    %cst_16 = arith.constant dense<0.000000e+00> : vector<8x8xf32>
    %15 = tpu.matmul %13, %14, %cst_16 {dimension_numbers = #tpu.dot_dimension_numbers<[1], [1], [0], [0], [0, 0, 1, 0], [], []>} : vector<8x128xbf16>, vector<8x128xbf16>, vector<8x8xf32> -> vector<8x8xf32>
    %cst_17 = arith.constant 0.0883883461 : f32
    %16 = vector.broadcast %cst_17 : f32 to vector<8x8xf32>
    %17 = arith.mulf %15, %16 : vector<8x8xf32>
    %cst_18 = arith.constant 0.000000e+00 : f32
    %18 = vector.broadcast %cst_18 : f32 to vector<1x8xf32>
    %19 = arith.cmpf ogt, %4, %18 : vector<1x8xf32>
    %cst_19 = arith.constant -1.000000e+30 : f32
    %20 = vector.shape_cast %19 : vector<1x8xi1> to vector<1x8xi1>
    %21 = vector.broadcast %20 : vector<1x8xi1> to vector<8x8xi1>
    %22 = vector.broadcast %cst_19 : f32 to vector<8x8xf32>
    %23 = arith.select %21, %17, %22 : vector<8x8xi1>, vector<8x8xf32>
    %cst_20 = arith.constant dense<0xFF800000> : vector<8xf32>
    %24 = vector.multi_reduction <maximumf>, %23, %cst_20 [1] : vector<8x8xf32> to vector<8xf32>
    %25 = vector.shape_cast %24 : vector<8xf32> to vector<8x1xf32>
    %26 = vector.broadcast %25 : vector<8x1xf32> to vector<8x8xf32>
    %27 = arith.subf %23, %26 : vector<8x8xf32>
    %28 = math.exp %27 : vector<8x8xf32>
    %cst_21 = arith.constant dense<0.000000e+00> : vector<8xf32>
    %29 = vector.multi_reduction <add>, %28, %cst_21 [1] : vector<8x8xf32> to vector<8xf32>
    %30 = vector.shape_cast %29 : vector<8xf32> to vector<8x1xf32>
    %31 = tpu.reciprocal %30 {approx = true} : vector<8x1xf32> -> vector<8x1xf32>
    %32 = vector.broadcast %31 : vector<8x1xf32> to vector<8x8xf32>
    %33 = arith.mulf %28, %32 : vector<8x8xf32>
    %34 = arith.truncf %33 : vector<8x8xf32> to vector<8x8xbf16>
    %35 = arith.truncf %12 : vector<8x128xf32> to vector<8x128xbf16>
    %cst_22 = arith.constant dense<0.000000e+00> : vector<8x128xf32>
    %36 = tpu.matmul %34, %35, %cst_22 {dimension_numbers = #tpu.dot_dimension_numbers<[1], [0], [0], [1], [0, 0, 1, 1], [], []>} : vector<8x8xbf16>, vector<8x128xbf16>, vector<8x128xf32> -> vector<8x128xf32>
    %37 = arith.truncf %36 : vector<8x128xf32> to vector<8x128xbf16>
    %c0_23 = arith.constant 0 : index
    %c0_24 = arith.constant 0 : index
    %38 = vector.load %arg7[%c0_23, %c0_24] : memref<128x128xbf16, #tpu.memory_space<vmem>>, vector<128x128xbf16>
    %cst_25 = arith.constant dense<0.000000e+00> : vector<8x128xf32>
    %39 = tpu.matmul %37, %38, %cst_25 {dimension_numbers = #tpu.dot_dimension_numbers<[1], [0], [0], [1], [0, 0, 1, 1], [], []>} : vector<8x128xbf16>, vector<128x128xbf16>, vector<8x128xf32> -> vector<8x128xf32>
    %40 = arith.addf %2, %39 : vector<8x128xf32>
    %cst_26 = arith.constant dense<0.000000e+00> : vector<8xf32>
    %41 = vector.multi_reduction <add>, %40, %cst_26 [1] : vector<8x128xf32> to vector<8xf32>
    %42 = vector.shape_cast %41 : vector<8xf32> to vector<8x1xf32>
    %cst_27 = arith.constant 1.280000e+02 : f32
    %43 = vector.broadcast %cst_27 : f32 to vector<8x1xf32>
    %44 = arith.divf %42, %43 : vector<8x1xf32>
    %45 = vector.broadcast %44 : vector<8x1xf32> to vector<8x128xf32>
    %46 = arith.subf %40, %45 : vector<8x128xf32>
    %47 = vector.broadcast %44 : vector<8x1xf32> to vector<8x128xf32>
    %48 = arith.subf %40, %47 : vector<8x128xf32>
    %49 = arith.mulf %46, %48 : vector<8x128xf32>
    %cst_28 = arith.constant dense<0.000000e+00> : vector<8xf32>
    %50 = vector.multi_reduction <add>, %49, %cst_28 [1] : vector<8x128xf32> to vector<8xf32>
    %51 = vector.shape_cast %50 : vector<8xf32> to vector<8x1xf32>
    %cst_29 = arith.constant 1.280000e+02 : f32
    %52 = vector.broadcast %cst_29 : f32 to vector<8x1xf32>
    %53 = arith.divf %51, %52 : vector<8x1xf32>
    %54 = vector.broadcast %44 : vector<8x1xf32> to vector<8x128xf32>
    %55 = arith.subf %40, %54 : vector<8x128xf32>
    %cst_30 = arith.constant 9.99999974E-6 : f32
    %56 = vector.broadcast %cst_30 : f32 to vector<8x1xf32>
    %57 = arith.addf %53, %56 : vector<8x1xf32>
    %58 = math.rsqrt %57 : vector<8x1xf32>
    %59 = vector.broadcast %58 : vector<8x1xf32> to vector<8x128xf32>
    %60 = arith.mulf %55, %59 : vector<8x128xf32>
    %61 = arith.truncf %60 : vector<8x128xf32> to vector<8x128xbf16>
    %c0_31 = arith.constant 0 : index
    %c0_32 = arith.constant 0 : index
    %62 = vector.load %arg8[%c0_31, %c0_32] : memref<128x256xbf16, #tpu.memory_space<vmem>>, vector<128x256xbf16>
    %cst_33 = arith.constant dense<0.000000e+00> : vector<8x256xf32>
    %63 = tpu.matmul %61, %62, %cst_33 {dimension_numbers = #tpu.dot_dimension_numbers<[1], [0], [0], [1], [0, 0, 1, 1], [], []>} : vector<8x128xbf16>, vector<128x256xbf16>, vector<8x256xf32> -> vector<8x256xf32>
    %cst_34 = arith.constant 0.000000e+00 : f32
    %64 = vector.broadcast %cst_34 : f32 to vector<8x256xf32>
    %65 = arith.maximumf %63, %64 : vector<8x256xf32>
    %66 = arith.truncf %65 : vector<8x256xf32> to vector<8x256xbf16>
    %c0_35 = arith.constant 0 : index
    %c0_36 = arith.constant 0 : index
    %67 = vector.load %arg9[%c0_35, %c0_36] : memref<256x128xbf16, #tpu.memory_space<vmem>>, vector<256x128xbf16>
    %cst_37 = arith.constant dense<0.000000e+00> : vector<8x128xf32>
    %68 = tpu.matmul %66, %67, %cst_37 {dimension_numbers = #tpu.dot_dimension_numbers<[1], [0], [0], [1], [0, 0, 1, 1], [], []>} : vector<8x256xbf16>, vector<256x128xbf16>, vector<8x128xf32> -> vector<8x128xf32>
    %69 = arith.addf %60, %68 : vector<8x128xf32>
    %cst_38 = arith.constant dense<0.000000e+00> : vector<8xf32>
    %70 = vector.multi_reduction <add>, %69, %cst_38 [1] : vector<8x128xf32> to vector<8xf32>
    %71 = vector.shape_cast %70 : vector<8xf32> to vector<8x1xf32>
    %cst_39 = arith.constant 1.280000e+02 : f32
    %72 = vector.broadcast %cst_39 : f32 to vector<8x1xf32>
    %73 = arith.divf %71, %72 : vector<8x1xf32>
    %74 = vector.broadcast %73 : vector<8x1xf32> to vector<8x128xf32>
    %75 = arith.subf %69, %74 : vector<8x128xf32>
    %76 = vector.broadcast %73 : vector<8x1xf32> to vector<8x128xf32>
    %77 = arith.subf %69, %76 : vector<8x128xf32>
    %78 = arith.mulf %75, %77 : vector<8x128xf32>
    %cst_40 = arith.constant dense<0.000000e+00> : vector<8xf32>
    %79 = vector.multi_reduction <add>, %78, %cst_40 [1] : vector<8x128xf32> to vector<8xf32>
    %80 = vector.shape_cast %79 : vector<8xf32> to vector<8x1xf32>
    %cst_41 = arith.constant 1.280000e+02 : f32
    %81 = vector.broadcast %cst_41 : f32 to vector<8x1xf32>
    %82 = arith.divf %80, %81 : vector<8x1xf32>
    %83 = vector.broadcast %73 : vector<8x1xf32> to vector<8x128xf32>
    %84 = arith.subf %69, %83 : vector<8x128xf32>
    %cst_42 = arith.constant 9.99999974E-6 : f32
    %85 = vector.broadcast %cst_42 : f32 to vector<8x1xf32>
    %86 = arith.addf %82, %85 : vector<8x1xf32>
    %87 = math.rsqrt %86 : vector<8x1xf32>
    %88 = vector.broadcast %87 : vector<8x1xf32> to vector<8x128xf32>
    %89 = arith.mulf %84, %88 : vector<8x128xf32>
    %90 = arith.truncf %89 : vector<8x128xf32> to vector<8x128xbf16>
    %c0_43 = arith.constant 0 : index
    %c0_44 = arith.constant 0 : index
    %91 = vector.load %arg10[%c0_43, %c0_44] : memref<128x128xbf16, #tpu.memory_space<vmem>>, vector<128x128xbf16>
    %cst_45 = arith.constant dense<0.000000e+00> : vector<8x128xf32>
    %92 = tpu.matmul %90, %91, %cst_45 {dimension_numbers = #tpu.dot_dimension_numbers<[1], [0], [0], [1], [0, 0, 1, 1], [], []>} : vector<8x128xbf16>, vector<128x128xbf16>, vector<8x128xf32> -> vector<8x128xf32>
    %c0_46 = arith.constant 0 : index
    %c0_47 = arith.constant 0 : index
    %93 = vector.load %arg11[%c0_46, %c0_47] : memref<1x128xf32, #tpu.memory_space<vmem>>, vector<1x128xf32>
    %94 = vector.broadcast %93 : vector<1x128xf32> to vector<8x128xf32>
    %95 = arith.addf %92, %94 : vector<8x128xf32>
    %c0_48 = arith.constant 0 : index
    %c0_49 = arith.constant 0 : index
    %c0_50 = arith.constant 0 : index
    %96 = vector.load %arg12[%c0_48, %c0_49, %c0_50] : memref<1x8x128xf32, #tpu.memory_space<vmem>>, vector<1x8x128xf32>
    %97 = vector.shape_cast %96 : vector<1x8x128xf32> to vector<8x128xf32>
    %98 = vector.shape_cast %95 : vector<8x128xf32> to vector<1x8x128xf32>
    tpu.vector_store %arg12[%c0_48, %c0_49, %c0_50], %98 {strides = array<i32>} : memref<1x8x128xf32, #tpu.memory_space<vmem>>, vector<1x8x128xf32>,
    %99 = tpu.iota {dimensions = array<i32: 1>} : vector<8x128xi32>
    %c4_i32 = arith.constant 4 : i32
    %100 = vector.broadcast %c4_i32 : i32 to vector<8x128xi32>
    %101 = arith.cmpi slt, %99, %100 : vector<8x128xi32>
    %cst_51 = arith.constant -1.000000e+30 : f32
    %102 = vector.broadcast %cst_51 : f32 to vector<8x128xf32>
    %103 = arith.select %101, %95, %102 : vector<8x128xi1>, vector<8x128xf32>
    %cst_52 = arith.constant dense<0xFF800000> : vector<8xf32>
    %104 = vector.multi_reduction <maximumf>, %103, %cst_52 [1] : vector<8x128xf32> to vector<8xf32>
    %105 = vector.shape_cast %104 : vector<8xf32> to vector<8x1xf32>
    %106 = vector.broadcast %105 : vector<8x1xf32> to vector<8x128xf32>
    %107 = arith.subf %103, %106 : vector<8x128xf32>
    %108 = math.exp %107 : vector<8x128xf32>
    %cst_53 = arith.constant dense<0.000000e+00> : vector<8xf32>
    %109 = vector.multi_reduction <add>, %108, %cst_53 [1] : vector<8x128xf32> to vector<8xf32>
    %110 = vector.shape_cast %109 : vector<8xf32> to vector<8x1xf32>
    %111 = math.log %110 : vector<8x1xf32>
    %112 = arith.addf %105, %111 : vector<8x1xf32>
    %113 = vector.broadcast %6 : vector<8x1xi32> to vector<8x128xi32>
    %114 = arith.cmpi eq, %99, %113 : vector<8x128xi32>
    %115 = arith.extui %114 : vector<8x128xi1> to vector<8x128xi32>
    %116 = arith.sitofp %115 : vector<8x128xi32> to vector<8x128xf32>
    %117 = arith.mulf %95, %116 : vector<8x128xf32>
    %cst_54 = arith.constant dense<0.000000e+00> : vector<8xf32>
    %118 = vector.multi_reduction <add>, %117, %cst_54 [1] : vector<8x128xf32> to vector<8xf32>
    %119 = vector.shape_cast %118 : vector<8xf32> to vector<8x1xf32>
    %c-100_i32 = arith.constant -100 : i32
    %120 = vector.broadcast %c-100_i32 : i32 to vector<8x1xi32>
    %121 = arith.cmpi ne, %6, %120 : vector<8x1xi32>
    %122 = arith.extui %121 : vector<8x1xi1> to vector<8x1xi32>
    %123 = arith.sitofp %122 : vector<8x1xi32> to vector<8x1xf32>
    %124 = arith.subf %112, %119 : vector<8x1xf32>
    %125 = arith.mulf %124, %123 : vector<8x1xf32>
    %126 = vector.shape_cast %125 : vector<8x1xf32> to vector<1x8x1xf32>
    %cst_55 = arith.constant dense<0.000000e+00> : vector<1xf32>
    %127 = vector.multi_reduction <add>, %126, %cst_55 [1, 2] : vector<1x8x1xf32> to vector<1xf32>
    %128 = vector.shape_cast %127 : vector<1xf32> to vector<1x1x1xf32>
    %129 = vector.extract %128[0, 0, 0] : f32 from vector<1x1x1xf32>
    %130 = vector.shape_cast %123 : vector<8x1xf32> to vector<1x8x1xf32>
    %cst_56 = arith.constant dense<0.000000e+00> : vector<1xf32>
    %131 = vector.multi_reduction <add>, %130, %cst_56 [1, 2] : vector<1x8x1xf32> to vector<1xf32>
    %132 = vector.shape_cast %131 : vector<1xf32> to vector<1x1x1xf32>
    %133 = vector.extract %132[0, 0, 0] : f32 from vector<1x1x1xf32>
    %134 = tpu.iota {dimensions = array<i32: 1>} : vector<1x128xi32>
    %c0_i32 = arith.constant 0 : i32
    %135 = vector.broadcast %c0_i32 : i32 to vector<1x128xi32>
    %136 = arith.cmpi eq, %134, %135 : vector<1x128xi32>
    %c1_i32 = arith.constant 1 : i32
    %137 = vector.broadcast %c1_i32 : i32 to vector<1x128xi32>
    %138 = arith.cmpi eq, %134, %137 : vector<1x128xi32>
    %cst_57 = arith.constant 0.000000e+00 : f32
    %139 = vector.broadcast %133 : f32 to vector<1x128xf32>
    %140 = vector.broadcast %cst_57 : f32 to vector<1x128xf32>
    %141 = arith.select %138, %139, %140 : vector<1x128xi1>, vector<1x128xf32>
    %142 = vector.broadcast %129 : f32 to vector<1x128xf32>
    %143 = arith.select %136, %142, %141 : vector<1x128xi1>, vector<1x128xf32>
    %c0_58 = arith.constant 0 : index
    %c0_59 = arith.constant 0 : index
    %c0_60 = arith.constant 0 : index
    %144 = vector.load %arg13[%c0_58, %c0_59, %c0_60] : memref<1x1x128xf32, #tpu.memory_space<vmem>>, vector<1x1x128xf32>
    %145 = vector.shape_cast %144 : vector<1x1x128xf32> to vector<1x128xf32>
    %146 = vector.shape_cast %143 : vector<1x128xf32> to vector<1x1x128xf32>
    tpu.vector_store %arg13[%c0_58, %c0_59, %c0_60], %146 {strides = array<i32>} : memref<1x1x128xf32, #tpu.memory_space<vmem>>, vector<1x1x128xf32>,
    return
  }
  func.func @transform_0(%arg0: i32) -> (i32, i32, i32) {
    %c0_i32 = arith.constant 0 : i32
    %c0_i32_0 = arith.constant 0 : i32
    %c0_i32_1 = arith.constant 0 : i32
    return %arg0, %c0_i32, %c0_i32_0 : i32, i32, i32
  }
  func.func @transform_1(%arg0: i32) -> (i32, i32, i32) {
    %c0_i32 = arith.constant 0 : i32
    %c0_i32_0 = arith.constant 0 : i32
    %c0_i32_1 = arith.constant 0 : i32
    return %arg0, %c0_i32, %c0_i32_0 : i32, i32, i32
  }
  func.func @transform_2(%arg0: i32) -> (i32, i32, i32) {
    %c0_i32 = arith.constant 0 : i32
    %c0_i32_0 = arith.constant 0 : i32
    %c0_i32_1 = arith.constant 0 : i32
    return %arg0, %c0_i32, %c0_i32_0 : i32, i32, i32
  }
  func.func @transform_3(%arg0: i32) -> (i32, i32) {
    %c0_i32 = arith.constant 0 : i32
    %c0_i32_0 = arith.constant 0 : i32
    %c0_i32_1 = arith.constant 0 : i32
    return %c0_i32, %c0_i32_0 : i32, i32
  }
  func.func @transform_4(%arg0: i32) -> (i32, i32) {
    %c0_i32 = arith.constant 0 : i32
    %c0_i32_0 = arith.constant 0 : i32
    %c0_i32_1 = arith.constant 0 : i32
    return %c0_i32, %c0_i32_0 : i32, i32
  }
  func.func @transform_5(%arg0: i32) -> (i32, i32) {
    %c0_i32 = arith.constant 0 : i32
    %c0_i32_0 = arith.constant 0 : i32
    %c0_i32_1 = arith.constant 0 : i32
    return %c0_i32, %c0_i32_0 : i32, i32
  }
  func.func @transform_6(%arg0: i32) -> (i32, i32) {
    %c0_i32 = arith.constant 0 : i32
    %c0_i32_0 = arith.constant 0 : i32
    %c0_i32_1 = arith.constant 0 : i32
    return %c0_i32, %c0_i32_0 : i32, i32
  }
  func.func @transform_7(%arg0: i32) -> (i32, i32) {
    %c0_i32 = arith.constant 0 : i32
    %c0_i32_0 = arith.constant 0 : i32
    %c0_i32_1 = arith.constant 0 : i32
    return %c0_i32, %c0_i32_0 : i32, i32
  }
  func.func @transform_8(%arg0: i32) -> (i32, i32) {
    %c0_i32 = arith.constant 0 : i32
    %c0_i32_0 = arith.constant 0 : i32
    %c0_i32_1 = arith.constant 0 : i32
    return %c0_i32, %c0_i32_0 : i32, i32
  }
  func.func @transform_9(%arg0: i32) -> (i32, i32) {
    %c0_i32 = arith.constant 0 : i32
    %c0_i32_0 = arith.constant 0 : i32
    %c0_i32_1 = arith.constant 0 : i32
    return %c0_i32, %c0_i32_0 : i32, i32
  }
  func.func @transform_10(%arg0: i32) -> (i32, i32) {
    %c0_i32 = arith.constant 0 : i32
    %c0_i32_0 = arith.constant 0 : i32
    %c0_i32_1 = arith.constant 0 : i32
    return %c0_i32, %c0_i32_0 : i32, i32
  }
  func.func @transform_11(%arg0: i32) -> (i32, i32, i32) {
    %c0_i32 = arith.constant 0 : i32
    %c0_i32_0 = arith.constant 0 : i32
    %c0_i32_1 = arith.constant 0 : i32
    return %arg0, %c0_i32, %c0_i32_0 : i32, i32, i32
  }
  func.func @transform_12(%arg0: i32) -> (i32, i32, i32) {
    %c0_i32 = arith.constant 0 : i32
    %c0_i32_0 = arith.constant 0 : i32
    %c0_i32_1 = arith.constant 0 : i32
    return %arg0, %c0_i32, %c0_i32_0 : i32, i32, i32
  }
}

</mosaic_0001>

<llo_original>
// kernel: xlnet_classifier_forward.1
$region0: #{xlnet_classifier_forward.1}
  #allocation0 [shape = 'u32[]', space=smem, size = 0x4, offset = 0x4, fixed_abs, tag = 'smem constant byte address 0x4 - core index']
  #allocation1 [shape = 'u32[144,128]{1,0:T(1,128)}', space=vmem, size = 0x12000, scoped, tag = 'internal scratch']
  %s0 = inlined_call_operand.vmem [shape: bf16[2,8,128], index: 0, kind: input, shape index: {}]
  %s1 = inlined_call_operand.vmem [shape: f32[2,1,8], index: 1, kind: input, shape index: {}]
  %s2 = inlined_call_operand.vmem [shape: s32[2,8,1], index: 2, kind: input, shape index: {}]
  %s3 = inlined_call_operand.hbm [shape: bf16[128,128], index: 3, kind: input, shape index: {}]
  %s4 = inlined_call_operand.hbm [shape: bf16[128,128], index: 4, kind: input, shape index: {}]
  %s5 = inlined_call_operand.hbm [shape: bf16[128,128], index: 5, kind: input, shape index: {}]
  %s6 = inlined_call_operand.hbm [shape: bf16[128,128], index: 6, kind: input, shape index: {}]
  %s7 = inlined_call_operand.vmem [shape: bf16[128,256], index: 7, kind: input, shape index: {}]
  %s8 = inlined_call_operand.hbm [shape: bf16[256,128], index: 8, kind: input, shape index: {}]
  %s9 = inlined_call_operand.hbm [shape: bf16[128,128], index: 9, kind: input, shape index: {}]
  %s10 = inlined_call_operand.vmem [shape: f32[1,128], index: 10, kind: input, shape index: {}]
  %s11 = inlined_call_operand.vmem [shape: f32[2,8,128], index: 11, kind: output, shape index: {0}]
  %s12 = inlined_call_operand.vmem [shape: f32[2,1,128], index: 12, kind: output, shape index: {1}]
  %13 = xla_tuple %s11, %s12
  %s14 = sld [smem:[#allocation0]]
  $region109: #{xlnet_classifier_forward.1} parent=0
    _
  %s16 = ssub.s32 1, %s14
  %s17 = scalar_select 0, %s16, %s14
  $region1: #{xlnet_classifier_forward.1} parent=0
    #allocation2 [shape = 'u8[32768]{0}', space=vmem, size = 0x8000, scoped, tag = 'input window, operand 3, single buffered']
    #allocation3 [shape = 's32[2]{0}', space=sflag, size = 0x8, scoped, tag = 'scoped memory for xlnet_classifier_forward.1']
    #allocation4 [shape = 'u8[32768]{0}', space=vmem, size = 0x8000, scoped, tag = 'input window, operand 4, single buffered']
    #allocation5 [shape = 's32[1]{0}', space=sflag, size = 0x4, scoped, tag = 'scoped memory for xlnet_classifier_forward.1']
    #allocation6 [shape = 'u8[32768]{0}', space=vmem, size = 0x8000, scoped, tag = 'input window, operand 5, single buffered']
    #allocation7 [shape = 'u8[32768]{0}', space=vmem, size = 0x8000, scoped, tag = 'input window, operand 6, single buffered']
    #allocation8 [shape = 's32[1]{0}', space=sflag, size = 0x4, scoped, tag = 'scoped memory for xlnet_classifier_forward.1']
    #allocation9 [shape = 'u8[65536]{0}', space=vmem, size = 0x10000, scoped, tag = 'input window, operand 8, single buffered']
    #allocation10 [shape = 'u8[32768]{0}', space=vmem, size = 0x8000, scoped, tag = 'input window, operand 9, single buffered']
    #allocation11 [shape = 's32[1]{0}', space=sflag, size = 0x4, scoped, tag = 'scoped memory for xlnet_classifier_forward.1']
    %18 = vsyncpa [#allocation3], 0
    %19 = vsyncpa [#allocation5], 0
    %20 = vsyncpa [#allocation8], 0
    %21 = vsyncpa [#allocation11], 0
    loop: start=0, step=1, limit=4
    $region2: #{xlnet_classifier_forward.1} parent=1 // loop_pre_header
      _
    $region3: #{xlnet_classifier_forward.1} parent=1 // loop_header
      %s23 = sphi 0, %s27
      %p24 = scmp.ge.s32.totalorder %s23, 4
      %s33 = sphi 0, %s35
      %s36 = sphi 0, %s33
      %s37 = sphi 0, %s36
      %s53 = sphi 0, %s37
      %s59 = sphi 0, %s61
      %s62 = sphi 0, %s59
      %s63 = sphi 0, %s62
      %s79 = sphi 0, %s63
      %s85 = sphi 0, %s87
      %s88 = sphi 0, %s85
      %s89 = sphi 0, %s88
      %s105 = sphi 0, %s89
      %s109 = sphi 0, %s109
      %s111 = sphi 0, %s109
      %s112 = sphi 0, %s111
      %s126 = sphi 0, %s112
      %s130 = sphi 0, %s130
      %s132 = sphi 0, %s130
      %s133 = sphi 0, %s132
      %s147 = sphi 0, %s133
      %s151 = sphi 0, %s151
      %s153 = sphi 0, %s151
      %s154 = sphi 0, %s153
      %s168 = sphi 0, %s154
      %s172 = sphi 0, %s172
      %s174 = sphi 0, %s172
      %s175 = sphi 0, %s174
      %s189 = sphi 0, %s175
      %s193 = sphi 0, %s193
      %s195 = sphi 0, %s193
      %s196 = sphi 0, %s195
      %s210 = sphi 0, %s196
      %s214 = sphi 0, %s214
      %s216 = sphi 0, %s214
      %s217 = sphi 0, %s216
      %s231 = sphi 0, %s217
      %s235 = sphi 0, %s235
      %s237 = sphi 0, %s235
      %s238 = sphi 0, %s237
      %s252 = sphi 0, %s238
      %s256 = sphi 0, %s256
      %s258 = sphi 0, %s256
      %s259 = sphi 0, %s258
      %s273 = sphi 0, %s259
      %s279 = sphi 0, %s281
      %s282 = sphi 0, %s279
      %s283 = sphi 0, %s282
      %s299 = sphi 0, %s283
      %s305 = sphi 0, %s307
      %s308 = sphi 0, %s305
      %s309 = sphi 0, %s308
      %s325 = sphi 0, %s309
    $region4: #{xlnet_classifier_forward.1} parent=1 // loop_header_branch
      %26 = sbr.rel (%p24) target = $region8
    $region5: #{xlnet_classifier_forward.1} parent=1 // loop_body
      %s28 = ssub.s32 %s23, 1
      %s29 = ssub.s32 %s23, 2
      %s30 = sadd.s32 %s23, 1
      %s31 = ssub.s32 %s23, %s30
      %p32 = scmp.eq.s32.totalorder %s31, 0
      %s34 = sadd.s32 %s33, 1
      %s35 = scalar_select %p32, %s33, %s34
      %p38 = pneg %p32
      %p39 = scmp.eq.s32.totalorder %s23, 1
      %p40 = por %p38, %p39
      %p41 = scmp.ne.s32.totalorder %s33, %s36
      %p42 = scmp.eq.s32.totalorder %s23, 0
      %p43 = por %p41, %p42
      %p44 = scmp.ne.s32.totalorder %s33, %s36
      %p45 = scmp.eq.s32.totalorder %s28, 1
      %p46 = por %p44, %p45
      %p47 = scmp.ne.s32.totalorder %s36, %s37
      %p48 = scmp.eq.s32.totalorder %s28, 0
      %p49 = por %p47, %p48
      %p50 = scmp.ne.s32.totalorder %s36, %s37
      %p51 = scmp.eq.s32.totalorder %s29, 1
      %p52 = por %p50, %p51
      %p54 = scmp.ne.s32.totalorder %s37, %s53
      %p55 = scmp.eq.s32.totalorder %s29, 0
      %p56 = por %p54, %p55
      %s57 = ssub.s32 %s23, %s30
      %p58 = scmp.eq.s32.totalorder %s57, 0
      %s60 = sadd.s32 %s59, 1
      %s61 = scalar_select %p58, %s59, %s60
      %p64 = pneg %p58
      %p65 = scmp.eq.s32.totalorder %s23, 1
      %p66 = por %p64, %p65
      %p67 = scmp.ne.s32.totalorder %s59, %s62
      %p68 = scmp.eq.s32.totalorder %s23, 0
      %p69 = por %p67, %p68
      %p70 = scmp.ne.s32.totalorder %s59, %s62
      %p71 = scmp.eq.s32.totalorder %s28, 1
      %p72 = por %p70, %p71
      %p73 = scmp.ne.s32.totalorder %s62, %s63
      %p74 = scmp.eq.s32.totalorder %s28, 0
      %p75 = por %p73, %p74
      %p76 = scmp.ne.s32.totalorder %s62, %s63
      %p77 = scmp.eq.s32.totalorder %s29, 1
      %p78 = por %p76, %p77
      %p80 = scmp.ne.s32.totalorder %s63, %s79
      %p81 = scmp.eq.s32.totalorder %s29, 0
      %p82 = por %p80, %p81
      %s83 = ssub.s32 %s23, %s30
      %p84 = scmp.eq.s32.totalorder %s83, 0
      %s86 = sadd.s32 %s85, 1
      %s87 = scalar_select %p84, %s85, %s86
      %p90 = pneg %p84
      %p91 = scmp.eq.s32.totalorder %s23, 1
      %p92 = por %p90, %p91
      %p93 = scmp.ne.s32.totalorder %s85, %s88
      %p94 = scmp.eq.s32.totalorder %s23, 0
      %p95 = por %p93, %p94
      %p96 = scmp.ne.s32.totalorder %s85, %s88
      %p97 = scmp.eq.s32.totalorder %s28, 1
      %p98 = por %p96, %p97
      %p99 = scmp.ne.s32.totalorder %s88, %s89
      %p100 = scmp.eq.s32.totalorder %s28, 0
      %p101 = por %p99, %p100
      %p102 = scmp.ne.s32.totalorder %s88, %s89
      %p103 = scmp.eq.s32.totalorder %s29, 1
      %p104 = por %p102, %p103
      %p106 = scmp.ne.s32.totalorder %s89, %s105
      %p107 = scmp.eq.s32.totalorder %s29, 0
      %p108 = por %p106, %p107
      %s110 = sadd.s32 %s109, 1
      %p113 = scmp.eq.s32.totalorder %s23, 1
      %p114 = scmp.ne.s32.totalorder %s109, %s111
      %p115 = scmp.eq.s32.totalorder %s23, 0
      %p116 = por %p114, %p115
      %p117 = scmp.ne.s32.totalorder %s109, %s111
      %p118 = scmp.eq.s32.totalorder %s28, 1
      %p119 = por %p117, %p118
      %p120 = scmp.ne.s32.totalorder %s111, %s112
      %p121 = scmp.eq.s32.totalorder %s28, 0
      %p122 = por %p120, %p121
      %p123 = scmp.ne.s32.totalorder %s111, %s112
      %p124 = scmp.eq.s32.totalorder %s29, 1
      %p125 = por %p123, %p124
      %p127 = scmp.ne.s32.totalorder %s112, %s126
      %p128 = scmp.eq.s32.totalorder %s29, 0
      %p129 = por %p127, %p128
      %s131 = sadd.s32 %s130, 1
      %p134 = scmp.eq.s32.totalorder %s23, 1
      %p135 = scmp.ne.s32.totalorder %s130, %s132
      %p136 = scmp.eq.s32.totalorder %s23, 0
      %p137 = por %p135, %p136
      %p138 = scmp.ne.s32.totalorder %s130, %s132
      %p139 = scmp.eq.s32.totalorder %s28, 1
      %p140 = por %p138, %p139
      %p141 = scmp.ne.s32.totalorder %s132, %s133
      %p142 = scmp.eq.s32.totalorder %s28, 0
      %p143 = por %p141, %p142
      %p144 = scmp.ne.s32.totalorder %s132, %s133
      %p145 = scmp.eq.s32.totalorder %s29, 1
      %p146 = por %p144, %p145
      %p148 = scmp.ne.s32.totalorder %s133, %s147
      %p149 = scmp.eq.s32.totalorder %s29, 0
      %p150 = por %p148, %p149
      %s152 = sadd.s32 %s151, 1
      %p155 = scmp.eq.s32.totalorder %s23, 1
      %p156 = scmp.ne.s32.totalorder %s151, %s153
      %p157 = scmp.eq.s32.totalorder %s23, 0
      %p158 = por %p156, %p157
      %p159 = scmp.ne.s32.totalorder %s151, %s153
      %p160 = scmp.eq.s32.totalorder %s28, 1
      %p161 = por %p159, %p160
      %p162 = scmp.ne.s32.totalorder %s153, %s154
      %p163 = scmp.eq.s32.totalorder %s28, 0
      %p164 = por %p162, %p163
      %p165 = scmp.ne.s32.totalorder %s153, %s154
      %p166 = scmp.eq.s32.totalorder %s29, 1
      %p167 = por %p165, %p166
      %p169 = scmp.ne.s32.totalorder %s154, %s168
      %p170 = scmp.eq.s32.totalorder %s29, 0
      %p171 = por %p169, %p170
      %s173 = sadd.s32 %s172, 1
      %p176 = scmp.eq.s32.totalorder %s23, 1
      %p177 = scmp.ne.s32.totalorder %s172, %s174
      %p178 = scmp.eq.s32.totalorder %s23, 0
      %p179 = por %p177, %p178
      %p180 = scmp.ne.s32.totalorder %s172, %s174
      %p181 = scmp.eq.s32.totalorder %s28, 1
      %p182 = por %p180, %p181
      %p183 = scmp.ne.s32.totalorder %s174, %s175
      %p184 = scmp.eq.s32.totalorder %s28, 0
      %p185 = por %p183, %p184
      %p186 = scmp.ne.s32.totalorder %s174, %s175
      %p187 = scmp.eq.s32.totalorder %s29, 1
      %p188 = por %p186, %p187
      %p190 = scmp.ne.s32.totalorder %s175, %s189
      %p191 = scmp.eq.s32.totalorder %s29, 0
      %p192 = por %p190, %p191
      %s194 = sadd.s32 %s193, 1
      %p197 = scmp.eq.s32.totalorder %s23, 1
      %p198 = scmp.ne.s32.totalorder %s193, %s195
      %p199 = scmp.eq.s32.totalorder %s23, 0
      %p200 = por %p198, %p199
      %p201 = scmp.ne.s32.totalorder %s193, %s195
      %p202 = scmp.eq.s32.totalorder %s28, 1
      %p203 = por %p201, %p202
      %p204 = scmp.ne.s32.totalorder %s195, %s196
      %p205 = scmp.eq.s32.totalorder %s28, 0
      %p206 = por %p204, %p205
      %p207 = scmp.ne.s32.totalorder %s195, %s196
      %p208 = scmp.eq.s32.totalorder %s29, 1
      %p209 = por %p207, %p208
      %p211 = scmp.ne.s32.totalorder %s196, %s210
      %p212 = scmp.eq.s32.totalorder %s29, 0
      %p213 = por %p211, %p212
      %s215 = sadd.s32 %s214, 1
      %p218 = scmp.eq.s32.totalorder %s23, 1
      %p219 = scmp.ne.s32.totalorder %s214, %s216
      %p220 = scmp.eq.s32.totalorder %s23, 0
      %p221 = por %p219, %p220
      %p222 = scmp.ne.s32.totalorder %s214, %s216
      %p223 = scmp.eq.s32.totalorder %s28, 1
      %p224 = por %p222, %p223
      %p225 = scmp.ne.s32.totalorder %s216, %s217
      %p226 = scmp.eq.s32.totalorder %s28, 0
      %p227 = por %p225, %p226
      %p228 = scmp.ne.s32.totalorder %s216, %s217
      %p229 = scmp.eq.s32.totalorder %s29, 1
      %p230 = por %p228, %p229
      %p232 = scmp.ne.s32.totalorder %s217, %s231
      %p233 = scmp.eq.s32.totalorder %s29, 0
      %p234 = por %p232, %p233
      %s236 = sadd.s32 %s235, 1
      %p239 = scmp.eq.s32.totalorder %s23, 1
      %p240 = scmp.ne.s32.totalorder %s235, %s237
      %p241 = scmp.eq.s32.totalorder %s23, 0
      %p242 = por %p240, %p241
      %p243 = scmp.ne.s32.totalorder %s235, %s237
      %p244 = scmp.eq.s32.totalorder %s28, 1
      %p245 = por %p243, %p244
      %p246 = scmp.ne.s32.totalorder %s237, %s238
      %p247 = scmp.eq.s32.totalorder %s28, 0
      %p248 = por %p246, %p247
      %p249 = scmp.ne.s32.totalorder %s237, %s238
      %p250 = scmp.eq.s32.totalorder %s29, 1
      %p251 = por %p249, %p250
      %p253 = scmp.ne.s32.totalorder %s238, %s252
      %p254 = scmp.eq.s32.totalorder %s29, 0
      %p255 = por %p253, %p254
      %s257 = sadd.s32 %s256, 1
      %p260 = scmp.eq.s32.totalorder %s23, 1
      %p261 = scmp.ne.s32.totalorder %s256, %s258
      %p262 = scmp.eq.s32.totalorder %s23, 0
      %p263 = por %p261, %p262
      %p264 = scmp.ne.s32.totalorder %s256, %s258
      %p265 = scmp.eq.s32.totalorder %s28, 1
      %p266 = por %p264, %p265
      %p267 = scmp.ne.s32.totalorder %s258, %s259
      %p268 = scmp.eq.s32.totalorder %s28, 0
      %p269 = por %p267, %p268
      %p270 = scmp.ne.s32.totalorder %s258, %s259
      %p271 = scmp.eq.s32.totalorder %s29, 1
      %p272 = por %p270, %p271
      %p274 = scmp.ne.s32.totalorder %s259, %s273
      %p275 = scmp.eq.s32.totalorder %s29, 0
      %p276 = por %p274, %p275
      %s277 = ssub.s32 %s23, %s30
      %p278 = scmp.eq.s32.totalorder %s277, 0
      %s280 = sadd.s32 %s279, 1
      %s281 = scalar_select %p278, %s279, %s280
      %p284 = pneg %p278
      %p285 = scmp.eq.s32.totalorder %s23, 1
      %p286 = por %p284, %p285
      %p287 = scmp.ne.s32.totalorder %s279, %s282
      %p288 = scmp.eq.s32.totalorder %s23, 0
      %p289 = por %p287, %p288
      %p290 = scmp.ne.s32.totalorder %s279, %s282
      %p291 = scmp.eq.s32.totalorder %s28, 1
      %p292 = por %p290, %p291
      %p293 = scmp.ne.s32.totalorder %s282, %s283
      %p294 = scmp.eq.s32.totalorder %s28, 0
      %p295 = por %p293, %p294
      %p296 = scmp.ne.s32.totalorder %s282, %s283
      %p297 = scmp.eq.s32.totalorder %s29, 1
      %p298 = por %p296, %p297
      %p300 = scmp.ne.s32.totalorder %s283, %s299
      %p301 = scmp.eq.s32.totalorder %s29, 0
      %p302 = por %p300, %p301
      %s303 = ssub.s32 %s23, %s30
      %p304 = scmp.eq.s32.totalorder %s303, 0
      %s306 = sadd.s32 %s305, 1
      %s307 = scalar_select %p304, %s305, %s306
      %p310 = pneg %p304
      %p311 = scmp.eq.s32.totalorder %s23, 1
      %p312 = por %p310, %p311
      %p313 = scmp.ne.s32.totalorder %s305, %s308
      %p314 = scmp.eq.s32.totalorder %s23, 0
      %p315 = por %p313, %p314
      %p316 = scmp.ne.s32.totalorder %s305, %s308
      %p317 = scmp.eq.s32.totalorder %s28, 1
      %p318 = por %p316, %p317
      %p319 = scmp.ne.s32.totalorder %s308, %s309
      %p320 = scmp.eq.s32.totalorder %s28, 0
      %p321 = por %p319, %p320
      %p322 = scmp.ne.s32.totalorder %s308, %s309
      %p323 = scmp.eq.s32.totalorder %s29, 1
      %p324 = por %p322, %p323
      %p326 = scmp.ne.s32.totalorder %s309, %s325
      %p327 = scmp.eq.s32.totalorder %s29, 0
      %p328 = por %p326, %p327
      %p329 = scmp.le.s32.totalorder 1, %s23
      %p330 = scmp.lt.s32.totalorder %s23, 3
      %p331 = pnand %p329, %p330
      %p332 = pneg %p331
      // Predicated region
      $region9: #{xlnet_classifier_forward.1} parent=5 // pred_check
        _
      $region10: #{xlnet_classifier_forward.1} parent=5 // pred_check_branch
        %334 = sbr.rel (%p331) target = $region12
      $region11: #{xlnet_classifier_forward.1} parent=5 // pred_region
        %s335 = ssub.s32 %s23, 1
        // Predicated region
        $region13: #{xlnet_classifier_forward.1} parent=11 // pred_check
          %p336 = pneg %p122
        $region14: #{xlnet_classifier_forward.1} parent=11 // pred_check_branch
          %338 = sbr.rel (%p336) target = $region16
        $region15: #{xlnet_classifier_forward.1} parent=11 // pred_region
          %s340 = ssub.s32 1024, 1024
          %341 = vsyncadd [#allocation3], %s340
          %s342 = sshll.u32 [#allocation2], 4
          %s343 = int_to_ptr.vmem [resolvable:$true] %s342
          %348 = dma.hbm_to_vmem [thread:$0]  %s3, 1024, %s343, [#allocation3], 64, 64, 4
        $region16: #{xlnet_classifier_forward.1} parent=11 // pred_fallthru
          _
        // Predicated region
        $region17: #{xlnet_classifier_forward.1} parent=11 // pred_check
          %p349 = pneg %p143
        $region18: #{xlnet_classifier_forward.1} parent=11 // pred_check_branch
          %351 = sbr.rel (%p349) target = $region20
        $region19: #{xlnet_classifier_forward.1} parent=11 // pred_region
          %s353 = ssub.s32 1024, 1024
          %354 = vsyncadd [#allocation5], %s353
          %s355 = sshll.u32 [#allocation4], 4
          %s356 = int_to_ptr.vmem [resolvable:$true] %s355
          %361 = dma.hbm_to_vmem [thread:$0]  %s4, 1024, %s356, [#allocation5], 64, 64, 4
        $region20: #{xlnet_classifier_forward.1} parent=11 // pred_fallthru
          _
        // Predicated region
        $region21: #{xlnet_classifier_forward.1} parent=11 // pred_check
          %p362 = pneg %p164
        $region22: #{xlnet_classifier_forward.1} parent=11 // pred_check_branch
          %364 = sbr.rel (%p362) target = $region24
        $region23: #{xlnet_classifier_forward.1} parent=11 // pred_region
          %s366 = ssub.s32 1024, 1024
          %367 = vsyncadd [#allocation5], %s366
          %s368 = sshll.u32 [#allocation6], 4
          %s369 = int_to_ptr.vmem [resolvable:$true] %s368
          %374 = dma.hbm_to_vmem [thread:$0]  %s5, 1024, %s369, [#allocation5], 64, 64, 4
        $region24: #{xlnet_classifier_forward.1} parent=11 // pred_fallthru
          _
        // Predicated region
        $region25: #{xlnet_classifier_forward.1} parent=11 // pred_check
          %p375 = pneg %p185
        $region26: #{xlnet_classifier_forward.1} parent=11 // pred_check_branch
          %377 = sbr.rel (%p375) target = $region28
        $region27: #{xlnet_classifier_forward.1} parent=11 // pred_region
          %s379 = ssub.s32 1024, 1024
          %380 = vsyncadd [#allocation8], %s379
          %s381 = sshll.u32 [#allocation7], 4
          %s382 = int_to_ptr.vmem [resolvable:$true] %s381
          %387 = dma.hbm_to_vmem [thread:$0]  %s6, 1024, %s382, [#allocation8], 64, 64, 4
        $region28: #{xlnet_classifier_forward.1} parent=11 // pred_fallthru
          _
        // Predicated region
        $region29: #{xlnet_classifier_forward.1} parent=11 // pred_check
          %p388 = pneg %p206
        $region30: #{xlnet_classifier_forward.1} parent=11 // pred_check_branch
          %390 = sbr.rel (%p388) target = $region32
        $region31: #{xlnet_classifier_forward.1} parent=11 // pred_region
          _
        $region32: #{xlnet_classifier_forward.1} parent=11 // pred_fallthru
          _
        // Predicated region
        $region33: #{xlnet_classifier_forward.1} parent=11 // pred_check
          %p391 = pneg %p227
        $region34: #{xlnet_classifier_forward.1} parent=11 // pred_check_branch
          %393 = sbr.rel (%p391) target = $region36
        $region35: #{xlnet_classifier_forward.1} parent=11 // pred_region
          %s395 = ssub.s32 2048, 2048
          %396 = vsyncadd [#allocation8], %s395
          %s397 = sshll.u32 [#allocation9], 4
          %s398 = int_to_ptr.vmem [resolvable:$true] %s397
          %403 = dma.hbm_to_vmem [thread:$0]  %s8, 2048, %s398, [#allocation8], 64, 64, 4
        $region36: #{xlnet_classifier_forward.1} parent=11 // pred_fallthru
          _
        // Predicated region
        $region37: #{xlnet_classifier_forward.1} parent=11 // pred_check
          %p404 = pneg %p248
        $region38: #{xlnet_classifier_forward.1} parent=11 // pred_check_branch
          %406 = sbr.rel (%p404) target = $region40
        $region39: #{xlnet_classifier_forward.1} parent=11 // pred_region
          %s408 = ssub.s32 1024, 1024
          %409 = vsyncadd [#allocation11], %s408
          %s410 = sshll.u32 [#allocation10], 4
          %s411 = int_to_ptr.vmem [resolvable:$true] %s410
          %416 = dma.hbm_to_vmem [thread:$0]  %s9, 1024, %s411, [#allocation11], 64, 64, 4
        $region40: #{xlnet_classifier_forward.1} parent=11 // pred_fallthru
          _
        // Predicated region
        $region41: #{xlnet_classifier_forward.1} parent=11 // pred_check
          %p417 = pneg %p269
        $region42: #{xlnet_classifier_forward.1} parent=11 // pred_check_branch
          %419 = sbr.rel (%p417) target = $region44
        $region43: #{xlnet_classifier_forward.1} parent=11 // pred_region
          _
        $region44: #{xlnet_classifier_forward.1} parent=11 // pred_fallthru
          _
      $region12: #{xlnet_classifier_forward.1} parent=5 // pred_fallthru
        _
      %p420 = scmp.lt.s32.totalorder %s23, 2
      // Predicated region
      $region45: #{xlnet_classifier_forward.1} parent=5 // pred_check
        %p421 = pneg %p420
      $region46: #{xlnet_classifier_forward.1} parent=5 // pred_check_branch
        %423 = sbr.rel (%p421) target = $region48
      $region47: #{xlnet_classifier_forward.1} parent=5 // pred_region
        // Predicated region
        $region49: #{xlnet_classifier_forward.1} parent=47 // pred_check
          %p424 = pneg %p43
        $region50: #{xlnet_classifier_forward.1} parent=47 // pred_check_branch
          %426 = sbr.rel (%p424) target = $region52
        $region51: #{xlnet_classifier_forward.1} parent=47 // pred_region
          %p427 = scmp.lt.s32.totalorder %s23, 1
          %s428 = scalar_select %p427, %s23, 1
          %s429 = smul.addr %s428, 4
          %s430 = scalar_lea.vmem %s0, %s429
        $region52: #{xlnet_classifier_forward.1} parent=47 // pred_fallthru
          _
        // Predicated region
        $region53: #{xlnet_classifier_forward.1} parent=47 // pred_check
          %p431 = pneg %p69
        $region54: #{xlnet_classifier_forward.1} parent=47 // pred_check_branch
          %433 = sbr.rel (%p431) target = $region56
        $region55: #{xlnet_classifier_forward.1} parent=47 // pred_region
          %p434 = scmp.lt.s32.totalorder %s23, 1
          %s435 = scalar_select %p434, %s23, 1
          %s436 = scalar_lea.vmem %s1, %s435
        $region56: #{xlnet_classifier_forward.1} parent=47 // pred_fallthru
          _
        // Predicated region
        $region57: #{xlnet_classifier_forward.1} parent=47 // pred_check
          %p437 = pneg %p95
        $region58: #{xlnet_classifier_forward.1} parent=47 // pred_check_branch
          %439 = sbr.rel (%p437) target = $region60
        $region59: #{xlnet_classifier_forward.1} parent=47 // pred_region
          %p440 = scmp.lt.s32.totalorder %s23, 1
          %s441 = scalar_select %p440, %s23, 1
          %s442 = smul.addr %s441, 8
          %s443 = scalar_lea.vmem %s2, %s442
        $region60: #{xlnet_classifier_forward.1} parent=47 // pred_fallthru
          _
      $region48: #{xlnet_classifier_forward.1} parent=5 // pred_fallthru
        _
      %p444 = scmp.le.s32.totalorder 1, %s23
      %p445 = scmp.lt.s32.totalorder %s23, 3
      %p446 = pnand %p444, %p445
      %p447 = pneg %p446
      // Predicated region
      $region61: #{xlnet_classifier_forward.1} parent=5 // pred_check
        _
      $region62: #{xlnet_classifier_forward.1} parent=5 // pred_check_branch
        %449 = sbr.rel (%p446) target = $region64
      $region63: #{xlnet_classifier_forward.1} parent=5 // pred_region
        %s450 = ssub.s32 %s23, 1
        // Predicated region
        $region65: #{xlnet_classifier_forward.1} parent=63 // pred_check
          %p451 = pneg %p122
        $region66: #{xlnet_classifier_forward.1} parent=63 // pred_check_branch
          %453 = sbr.rel (%p451) target = $region68
        $region67: #{xlnet_classifier_forward.1} parent=63 // pred_region
          %454 = dma.done [#allocation3], 1024
        $region68: #{xlnet_classifier_forward.1} parent=63 // pred_fallthru
          _
        // Predicated region
        $region69: #{xlnet_classifier_forward.1} parent=63 // pred_check
          %p455 = pneg %p143
        $region70: #{xlnet_classifier_forward.1} parent=63 // pred_check_branch
          %457 = sbr.rel (%p455) target = $region72
        $region71: #{xlnet_classifier_forward.1} parent=63 // pred_region
          %458 = dma.done [#allocation5], 1024
        $region72: #{xlnet_classifier_forward.1} parent=63 // pred_fallthru
          _
        // Predicated region
        $region73: #{xlnet_classifier_forward.1} parent=63 // pred_check
          %p459 = pneg %p164
        $region74: #{xlnet_classifier_forward.1} parent=63 // pred_check_branch
          %461 = sbr.rel (%p459) target = $region76
        $region75: #{xlnet_classifier_forward.1} parent=63 // pred_region
          %462 = dma.done [#allocation5], 1024
        $region76: #{xlnet_classifier_forward.1} parent=63 // pred_fallthru
          _
        // Predicated region
        $region77: #{xlnet_classifier_forward.1} parent=63 // pred_check
          %p463 = pneg %p185
        $region78: #{xlnet_classifier_forward.1} parent=63 // pred_check_branch
          %465 = sbr.rel (%p463) target = $region80
        $region79: #{xlnet_classifier_forward.1} parent=63 // pred_region
          %466 = dma.done [#allocation8], 1024
        $region80: #{xlnet_classifier_forward.1} parent=63 // pred_fallthru
          _
        // Predicated region
        $region81: #{xlnet_classifier_forward.1} parent=63 // pred_check
          %p467 = pneg %p227
        $region82: #{xlnet_classifier_forward.1} parent=63 // pred_check_branch
          %469 = sbr.rel (%p467) target = $region84
        $region83: #{xlnet_classifier_forward.1} parent=63 // pred_region
          %470 = dma.done [#allocation8], 2048
        $region84: #{xlnet_classifier_forward.1} parent=63 // pred_fallthru
          _
        // Predicated region
        $region85: #{xlnet_classifier_forward.1} parent=63 // pred_check
          %p471 = pneg %p248
        $region86: #{xlnet_classifier_forward.1} parent=63 // pred_check_branch
          %473 = sbr.rel (%p471) target = $region88
        $region87: #{xlnet_classifier_forward.1} parent=63 // pred_region
          %474 = dma.done [#allocation11], 1024
        $region88: #{xlnet_classifier_forward.1} parent=63 // pred_fallthru
          _
        %p475 = scmp.lt.s32.totalorder %s28, 1
        %s476 = scalar_select %p475, %s28, 1
        %s477 = smul.addr %s476, 4
        %s478 = scalar_lea.vmem %s0, %s477
        %p479 = pneg %p49
        %p480 = pneg %p46
        %p481 = scmp.lt.s32.totalorder %s28, 1
        %s482 = scalar_select %p481, %s28, 1
        %s483 = scalar_lea.vmem %s1, %s482
        %p484 = pneg %p75
        %p485 = pneg %p72
        %p486 = scmp.lt.s32.totalorder %s28, 1
        %s487 = scalar_select %p486, %s28, 1
        %s488 = smul.addr %s487, 8
        %s489 = scalar_lea.vmem %s2, %s488
        %p490 = pneg %p101
        %p491 = pneg %p98
        %p492 = pneg %p122
        %p493 = pneg %p119
        %p494 = pneg %p143
        %p495 = pneg %p140
        %p496 = pneg %p164
        %p497 = pneg %p161
        %p498 = pneg %p185
        %p499 = pneg %p182
        %p500 = pneg %p206
        %p501 = pneg %p203
        %p502 = pneg %p227
        %p503 = pneg %p224
        %p504 = pneg %p248
        %p505 = pneg %p245
        %p506 = pneg %p269
        %p507 = pneg %p266
        %p508 = pneg %p295
        %p509 = pneg %p292
        %p510 = scmp.lt.s32.totalorder %s28, 1
        %s511 = scalar_select %p510, %s28, 1
        %s512 = smul.addr %s511, 8
        %s513 = scalar_lea.vmem %s11, %s512
        %p514 = pneg %p321
        %p515 = pneg %p318
        %p516 = scmp.lt.s32.totalorder %s28, 1
        %s517 = scalar_select %p516, %s28, 1
        %s518 = scalar_lea.vmem %s12, %s517
        %p519 = scmp.lt.s32.totalorder %s28, 1
        %s520 = scalar_select %p519, %s28, 1
        %s521 = smul.addr %s520, 4
        %s522 = scalar_lea.vmem %s0, %s521
        %p523 = scmp.lt.s32.totalorder %s28, 1
        %s524 = scalar_select %p523, %s28, 1
        %s525 = scalar_lea.vmem %s1, %s524
        %p526 = scmp.lt.s32.totalorder %s28, 1
        %s527 = scalar_select %p526, %s28, 1
        %s528 = smul.addr %s527, 8
        %s529 = scalar_lea.vmem %s2, %s528
        %p530 = scmp.lt.s32.totalorder %s28, 1
        %s531 = scalar_select %p530, %s28, 1
        %s532 = smul.addr %s531, 8
        %s533 = scalar_lea.vmem %s11, %s532
        %p534 = scmp.lt.s32.totalorder %s28, 1
        %s535 = scalar_select %p534, %s28, 1
        %s536 = scalar_lea.vmem %s12, %s535
        %v538 = vld [vmem:[%s522] sm:$0xf]
        %v539 = vunpack.c.l.bf16 %v538
        %v540 = vld [vmem:[%s525] sm:$0x1]
        %v541 = vld [vmem:[%s529] sm:$0xff]
        %v542 = vld [vmem:[#allocation2] sm:$0xf]
        %v543 = vld [vmem:[#allocation2 + $0x4] sm:$0xf]
        %v544 = vld [vmem:[#allocation2 + $0x8] sm:$0xf]
        %v545 = vld [vmem:[#allocation2 + $0xc] sm:$0xf]
        %v546 = vld [vmem:[#allocation2 + $0x10] sm:$0xf]
        %v547 = vld [vmem:[#allocation2 + $0x14] sm:$0xf]
        %v548 = vld [vmem:[#allocation2 + $0x18] sm:$0xf]
        %v549 = vld [vmem:[#allocation2 + $0x1c] sm:$0xf]
        %v550 = vld [vmem:[#allocation2 + $0x20] sm:$0xf]
        %v551 = vld [vmem:[#allocation2 + $0x24] sm:$0xf]
        %v552 = vld [vmem:[#allocation2 + $0x28] sm:$0xf]
        %v553 = vld [vmem:[#allocation2 + $0x2c] sm:$0xf]
        %v554 = vld [vmem:[#allocation2 + $0x30] sm:$0xf]
        %v555 = vld [vmem:[#allocation2 + $0x34] sm:$0xf]
        %v556 = vld [vmem:[#allocation2 + $0x38] sm:$0xf]
        %v557 = vld [vmem:[#allocation2 + $0x3c] sm:$0xf]
        %v574 = vunpack.c.l.b16 %v542
        %v575 = vunpack.c.l.b16 %v543
        %v576 = vunpack.c.l.b16 %v544
        %v577 = vunpack.c.l.b16 %v545
        %v578 = vunpack.c.l.b16 %v546
        %v579 = vunpack.c.l.b16 %v547
        %v580 = vunpack.c.l.b16 %v548
        %v581 = vunpack.c.l.b16 %v549
        %v582 = vunpack.c.l.b16 %v550
        %v583 = vunpack.c.l.b16 %v551
        %v584 = vunpack.c.l.b16 %v552
        %v585 = vunpack.c.l.b16 %v553
        %v586 = vunpack.c.l.b16 %v554
        %v587 = vunpack.c.l.b16 %v555
        %v588 = vunpack.c.l.b16 %v556
        %v589 = vunpack.c.l.b16 %v557
        %v590 = vpack.c.b16 %v575, %v574
        %v591 = vpack.c.b16 %v577, %v576
        %v592 = vpack.c.b16 %v579, %v578
        %v593 = vpack.c.b16 %v581, %v580
        %v594 = vpack.c.b16 %v583, %v582
        %v595 = vpack.c.b16 %v585, %v584
        %v596 = vpack.c.b16 %v587, %v586
        %v597 = vpack.c.b16 %v589, %v588
        %606 = vmatprep.subr.bf16.mxu0 0
        %607 = vmatpush1.bf16.msra.mxu0 %v597
        %608 = vmatprep.subr.bf16.mxu0 0
        %609 = vmatpush1.bf16.msra.mxu0 %v596
        %610 = vmatprep.subr.bf16.mxu0 0
        %611 = vmatpush1.bf16.msra.mxu0 %v595
        %612 = vmatprep.subr.bf16.mxu0 0
        %613 = vmatpush1.bf16.msra.mxu0 %v594
        %614 = vmatprep.subr.bf16.mxu0 0
        %615 = vmatpush1.bf16.msra.mxu0 %v593
        %616 = vmatprep.subr.bf16.mxu0 0
        %617 = vmatpush1.bf16.msra.mxu0 %v592
        %618 = vmatprep.subr.bf16.mxu0 0
        %619 = vmatpush1.bf16.msra.mxu0 %v591
        %620 = vmatprep.subr.bf16.mxu0 0
        %621 = vmatpush1.bf16.msra.mxu0 %v590
        %622 = vmatprep.subr.bf16.mxu0 0
        %623 = vmatpush2.bf16.msra.mxu0 0
        %624 = vmatprep.subr.bf16.mxu0 0
        %625 = vmatpush2.bf16.msra.mxu0 0
        %626 = vmatprep.subr.bf16.mxu0 0
        %627 = vmatpush2.bf16.msra.mxu0 0
        %628 = vmatprep.subr.bf16.mxu0 0
        %629 = vmatpush2.bf16.msra.mxu0 0
        %630 = vmatprep.subr.bf16.mxu0 0
        %631 = vmatpush2.bf16.msra.mxu0 0
        %632 = vmatprep.subr.bf16.mxu0 0
        %633 = vmatpush2.bf16.msra.mxu0 0
        %634 = vmatprep.subr.bf16.mxu0 0
        %635 = vmatpush2.bf16.msra.mxu0 0
        %636 = vmatprep.subr.bf16.mxu0 0
        %637 = vmatpush2.bf16.msra.mxu0 0
        %638 = vmatprep.mubr.bf16.mxu0 0
        %639 = vmatmul.mubr.bf16.gmra.mxu0 %v538
        %v640 = vpop.f32.mrf.mxu0
        %v641 = vadd.f32 0.0, %v640
        %v642 = vpop.f32.mrf.mxu0
        %v643 = vpop.f32.mrf.mxu0
        %v644 = vpop.f32.mrf.mxu0
        %645 = vdwg.mxu0
        %v646 = vld [vmem:[#allocation4] sm:$0xf]
        %v647 = vld [vmem:[#allocation4 + $0x4] sm:$0xf]
        %v648 = vld [vmem:[#allocation4 + $0x8] sm:$0xf]
        %v649 = vld [vmem:[#allocation4 + $0xc] sm:$0xf]
        %v650 = vld [vmem:[#allocation4 + $0x10] sm:$0xf]
        %v651 = vld [vmem:[#allocation4 + $0x14] sm:$0xf]
        %v652 = vld [vmem:[#allocation4 + $0x18] sm:$0xf]
        %v653 = vld [vmem:[#allocation4 + $0x1c] sm:$0xf]
        %v654 = vld [vmem:[#allocation4 + $0x20] sm:$0xf]
        %v655 = vld [vmem:[#allocation4 + $0x24] sm:$0xf]
        %v656 = vld [vmem:[#allocation4 + $0x28] sm:$0xf]
        %v657 = vld [vmem:[#allocation4 + $0x2c] sm:$0xf]
        %v658 = vld [vmem:[#allocation4 + $0x30] sm:$0xf]
        %v659 = vld [vmem:[#allocation4 + $0x34] sm:$0xf]
        %v660 = vld [vmem:[#allocation4 + $0x38] sm:$0xf]
        %v661 = vld [vmem:[#allocation4 + $0x3c] sm:$0xf]
        %v678 = vunpack.c.l.b16 %v646
        %v679 = vunpack.c.l.b16 %v647
        %v680 = vunpack.c.l.b16 %v648
        %v681 = vunpack.c.l.b16 %v649
        %v682 = vunpack.c.l.b16 %v650
        %v683 = vunpack.c.l.b16 %v651
        %v684 = vunpack.c.l.b16 %v652
        %v685 = vunpack.c.l.b16 %v653
        %v686 = vunpack.c.l.b16 %v654
        %v687 = vunpack.c.l.b16 %v655
        %v688 = vunpack.c.l.b16 %v656
        %v689 = vunpack.c.l.b16 %v657
        %v690 = vunpack.c.l.b16 %v658
        %v691 = vunpack.c.l.b16 %v659
        %v692 = vunpack.c.l.b16 %v660
        %v693 = vunpack.c.l.b16 %v661
        %v694 = vpack.c.b16 %v679, %v678
        %v695 = vpack.c.b16 %v681, %v680
        %v696 = vpack.c.b16 %v683, %v682
        %v697 = vpack.c.b16 %v685, %v684
        %v698 = vpack.c.b16 %v687, %v686
        %v699 = vpack.c.b16 %v689, %v688
        %v700 = vpack.c.b16 %v691, %v690
        %v701 = vpack.c.b16 %v693, %v692
        %710 = vmatprep.subr.bf16.mxu0 0
        %711 = vmatpush1.bf16.msra.mxu0 %v701
        %712 = vmatprep.subr.bf16.mxu0 0
        %713 = vmatpush1.bf16.msra.mxu0 %v700
        %714 = vmatprep.subr.bf16.mxu0 0
        %715 = vmatpush1.bf16.msra.mxu0 %v699
        %716 = vmatprep.subr.bf16.mxu0 0
        %717 = vmatpush1.bf16.msra.mxu0 %v698
        %718 = vmatprep.subr.bf16.mxu0 0
        %719 = vmatpush1.bf16.msra.mxu0 %v697
        %720 = vmatprep.subr.bf16.mxu0 0
        %721 = vmatpush1.bf16.msra.mxu0 %v696
        %722 = vmatprep.subr.bf16.mxu0 0
        %723 = vmatpush1.bf16.msra.mxu0 %v695
        %724 = vmatprep.subr.bf16.mxu0 0
        %725 = vmatpush1.bf16.msra.mxu0 %v694
        %726 = vmatprep.subr.bf16.mxu0 0
        %727 = vmatpush2.bf16.msra.mxu0 0
        %728 = vmatprep.subr.bf16.mxu0 0
        %729 = vmatpush2.bf16.msra.mxu0 0
        %730 = vmatprep.subr.bf16.mxu0 0
        %731 = vmatpush2.bf16.msra.mxu0 0
        %732 = vmatprep.subr.bf16.mxu0 0
        %733 = vmatpush2.bf16.msra.mxu0 0
        %734 = vmatprep.subr.bf16.mxu0 0
        %735 = vmatpush2.bf16.msra.mxu0 0
        %736 = vmatprep.subr.bf16.mxu0 0
        %737 = vmatpush2.bf16.msra.mxu0 0
        %738 = vmatprep.subr.bf16.mxu0 0
        %739 = vmatpush2.bf16.msra.mxu0 0
        %740 = vmatprep.subr.bf16.mxu0 0
        %741 = vmatpush2.bf16.msra.mxu0 0
        %742 = vmatprep.mubr.bf16.mxu0 0
        %743 = vmatmul.mubr.bf16.gmra.mxu0 %v538
        %v744 = vpop.f32.mrf.mxu0
        %v745 = vadd.f32 0.0, %v744
        %v746 = vpop.f32.mrf.mxu0
        %v747 = vpop.f32.mrf.mxu0
        %v748 = vpop.f32.mrf.mxu0
        %749 = vdwg.mxu0
        %v750 = vld [vmem:[#allocation6] sm:$0xf]
        %v751 = vld [vmem:[#allocation6 + $0x4] sm:$0xf]
        %v752 = vld [vmem:[#allocation6 + $0x8] sm:$0xf]
        %v753 = vld [vmem:[#allocation6 + $0xc] sm:$0xf]
        %v754 = vld [vmem:[#allocation6 + $0x10] sm:$0xf]
        %v755 = vld [vmem:[#allocation6 + $0x14] sm:$0xf]
        %v756 = vld [vmem:[#allocation6 + $0x18] sm:$0xf]
        %v757 = vld [vmem:[#allocation6 + $0x1c] sm:$0xf]
        %v758 = vld [vmem:[#allocation6 + $0x20] sm:$0xf]
        %v759 = vld [vmem:[#allocation6 + $0x24] sm:$0xf]
        %v760 = vld [vmem:[#allocation6 + $0x28] sm:$0xf]
        %v761 = vld [vmem:[#allocation6 + $0x2c] sm:$0xf]
        %v762 = vld [vmem:[#allocation6 + $0x30] sm:$0xf]
        %v763 = vld [vmem:[#allocation6 + $0x34] sm:$0xf]
        %v764 = vld [vmem:[#allocation6 + $0x38] sm:$0xf]
        %v765 = vld [vmem:[#allocation6 + $0x3c] sm:$0xf]
        %v782 = vunpack.c.l.b16 %v750
        %v783 = vunpack.c.l.b16 %v751
        %v784 = vunpack.c.l.b16 %v752
        %v785 = vunpack.c.l.b16 %v753
        %v786 = vunpack.c.l.b16 %v754
        %v787 = vunpack.c.l.b16 %v755
        %v788 = vunpack.c.l.b16 %v756
        %v789 = vunpack.c.l.b16 %v757
        %v790 = vunpack.c.l.b16 %v758
        %v791 = vunpack.c.l.b16 %v759
        %v792 = vunpack.c.l.b16 %v760
        %v793 = vunpack.c.l.b16 %v761
        %v794 = vunpack.c.l.b16 %v762
        %v795 = vunpack.c.l.b16 %v763
        %v796 = vunpack.c.l.b16 %v764
        %v797 = vunpack.c.l.b16 %v765
        %v798 = vpack.c.b16 %v783, %v782
        %v799 = vpack.c.b16 %v785, %v784
        %v800 = vpack.c.b16 %v787, %v786
        %v801 = vpack.c.b16 %v789, %v788
        %v802 = vpack.c.b16 %v791, %v790
        %v803 = vpack.c.b16 %v793, %v792
        %v804 = vpack.c.b16 %v795, %v794
        %v805 = vpack.c.b16 %v797, %v796
        %814 = vmatprep.subr.bf16.mxu0 0
        %815 = vmatpush1.bf16.msra.mxu0 %v805
        %816 = vmatprep.subr.bf16.mxu0 0
        %817 = vmatpush1.bf16.msra.mxu0 %v804
        %818 = vmatprep.subr.bf16.mxu0 0
        %819 = vmatpush1.bf16.msra.mxu0 %v803
        %820 = vmatprep.subr.bf16.mxu0 0
        %821 = vmatpush1.bf16.msra.mxu0 %v802
        %822 = vmatprep.subr.bf16.mxu0 0
        %823 = vmatpush1.bf16.msra.mxu0 %v801
        %824 = vmatprep.subr.bf16.mxu0 0
        %825 = vmatpush1.bf16.msra.mxu0 %v800
        %826 = vmatprep.subr.bf16.mxu0 0
        %827 = vmatpush1.bf16.msra.mxu0 %v799
        %828 = vmatprep.subr.bf16.mxu0 0
        %829 = vmatpush1.bf16.msra.mxu0 %v798
        %830 = vmatprep.subr.bf16.mxu0 0
        %831 = vmatpush2.bf16.msra.mxu0 0
        %832 = vmatprep.subr.bf16.mxu0 0
        %833 = vmatpush2.bf16.msra.mxu0 0
        %834 = vmatprep.subr.bf16.mxu0 0
        %835 = vmatpush2.bf16.msra.mxu0 0
        %836 = vmatprep.subr.bf16.mxu0 0
        %837 = vmatpush2.bf16.msra.mxu0 0
        %838 = vmatprep.subr.bf16.mxu0 0
        %839 = vmatpush2.bf16.msra.mxu0 0
        %840 = vmatprep.subr.bf16.mxu0 0
        %841 = vmatpush2.bf16.msra.mxu0 0
        %842 = vmatprep.subr.bf16.mxu0 0
        %843 = vmatpush2.bf16.msra.mxu0 0
        %844 = vmatprep.subr.bf16.mxu0 0
        %845 = vmatpush2.bf16.msra.mxu0 0
        %846 = vmatprep.mubr.bf16.mxu0 0
        %847 = vmatmul.mubr.bf16.gmra.mxu0 %v538
        %v848 = vpop.f32.mrf.mxu0
        %v849 = vadd.f32 0.0, %v848
        %v850 = vpop.f32.mrf.mxu0
        %v851 = vpop.f32.mrf.mxu0
        %v852 = vpop.f32.mrf.mxu0
        %853 = vdwg.mxu0
        %v854 = vpack.c.bf16 %v641, %v641
        %v855 = vpack.c.bf16 %v745, %v745
        %856 = vmatprep.subr.bf16.mxu0 0
        %857 = vmatpush1.bf16.xpose.msra.mxu0 0
        %858 = vmatprep.subr.bf16.mxu0 0
        %859 = vmatpush1.bf16.xpose.msra.mxu0 0
        %860 = vmatprep.subr.bf16.mxu0 0
        %861 = vmatpush1.bf16.xpose.msra.mxu0 0
        %862 = vmatprep.subr.bf16.mxu0 0
        %863 = vmatpush1.bf16.xpose.msra.mxu0 0
        %864 = vmatprep.subr.bf16.mxu0 0
        %865 = vmatpush1.bf16.xpose.msra.mxu0 0
        %866 = vmatprep.subr.bf16.mxu0 0
        %867 = vmatpush1.bf16.xpose.msra.mxu0 0
        %868 = vmatprep.subr.bf16.mxu0 0
        %869 = vmatpush1.bf16.xpose.msra.mxu0 0
        %870 = vmatprep.subr.bf16.mxu0 0
        %871 = vmatpush1.bf16.xpose.msra.mxu0 %v855
        %872 = vmatprep.subr.bf16.mxu0 0
        %873 = vmatpush2.bf16.xpose.msra.mxu0 0
        %874 = vmatprep.subr.bf16.mxu0 0
        %875 = vmatpush2.bf16.xpose.msra.mxu0 0
        %876 = vmatprep.subr.bf16.mxu0 0
        %877 = vmatpush2.bf16.xpose.msra.mxu0 0
        %878 = vmatprep.subr.bf16.mxu0 0
        %879 = vmatpush2.bf16.xpose.msra.mxu0 0
        %880 = vmatprep.subr.bf16.mxu0 0
        %881 = vmatpush2.bf16.xpose.msra.mxu0 0
        %882 = vmatprep.subr.bf16.mxu0 0
        %883 = vmatpush2.bf16.xpose.msra.mxu0 0
        %884 = vmatprep.subr.bf16.mxu0 0
        %885 = vmatpush2.bf16.xpose.msra.mxu0 0
        %886 = vmatprep.subr.bf16.mxu0 0
        %887 = vmatpush2.bf16.xpose.msra.mxu0 0
        %888 = vmatprep.mubr.bf16.mxu0 0
        %889 = vmatmul.mubr.bf16.gmra.mxu0 %v854
        %v890 = vpop.f32.mrf.mxu0
        %v891 = vadd.f32 0.0, %v890
        %v892 = vpop.f32.mrf.mxu0
        %v893 = vpop.f32.mrf.mxu0
        %v894 = vpop.f32.mrf.mxu0
        %895 = vdwg.mxu0
        %v896 = vmul.f32 %v891, 0.088388346
        %vm897 = vcmp.gt.f32.partialorder %v540, 0.0
        %v898 = vsel %vm897, 1, 0
        %v899 = vlaneseq
        %v900 = vshrl.u32 %v899, 7
        %v901 = vsub.s32 0, %v900
        %v902 = vrot.slane %v898, %v901
        %vm903 = vcmp.eq.s32.totalorder %v902, 1
        %v904 = vsel %vm903, %v896, -1e+30
        %vm905 = vcmask 64512
        %v906 = vsel %vm905, %v904, -inf
        %907 = vmax.xlane.f32.xlu0 %v906
        %v908 = vpop.xlane.xlu0 %907
        %v909 = vsub.f32 %v904, %v908
        %v910 = vmul.f32 %v909, 1.442695
        %v911 = vpow.pop %v910
        %v912 = vsel %vm905, %v911, 0.0
        %913 = vadd.xlane.f32.xlu0 %v912
        %v914 = vpop.xlane.xlu0 %913
        %v915 = vrcp.pop %v914
        %v916 = vmul.f32 %v911, %v915
        %v917 = vpack.c.bf16 %v916, %v916
        %v918 = vpack.c.bf16 %v849, %v849
        %v920 = vsel %vm905, %v917, 0
        %vm922 = vcmask 1043456
        %v924 = vsel %vm922, %v918, 0
        %926 = vmatprep.subr.bf16.mxu0 0
        %927 = vmatpush1.bf16.msra.mxu0 0
        %928 = vmatprep.subr.bf16.mxu0 0
        %929 = vmatpush1.bf16.msra.mxu0 0
        %930 = vmatprep.subr.bf16.mxu0 0
        %931 = vmatpush1.bf16.msra.mxu0 0
        %932 = vmatprep.subr.bf16.mxu0 0
        %933 = vmatpush1.bf16.msra.mxu0 0
        %934 = vmatprep.subr.bf16.mxu0 0
        %935 = vmatpush1.bf16.msra.mxu0 0
        %936 = vmatprep.subr.bf16.mxu0 0
        %937 = vmatpush1.bf16.msra.mxu0 0
        %938 = vmatprep.subr.bf16.mxu0 0
        %939 = vmatpush1.bf16.msra.mxu0 0
        %940 = vmatprep.subr.bf16.mxu0 0
        %941 = vmatpush1.bf16.msra.mxu0 %v924
        %942 = vmatprep.subr.bf16.mxu0 0
        %943 = vmatpush2.bf16.msra.mxu0 0
        %944 = vmatprep.subr.bf16.mxu0 0
        %945 = vmatpush2.bf16.msra.mxu0 0
        %946 = vmatprep.subr.bf16.mxu0 0
        %947 = vmatpush2.bf16.msra.mxu0 0
        %948 = vmatprep.subr.bf16.mxu0 0
        %949 = vmatpush2.bf16.msra.mxu0 0
        %950 = vmatprep.subr.bf16.mxu0 0
        %951 = vmatpush2.bf16.msra.mxu0 0
        %952 = vmatprep.subr.bf16.mxu0 0
        %953 = vmatpush2.bf16.msra.mxu0 0
        %954 = vmatprep.subr.bf16.mxu0 0
        %955 = vmatpush2.bf16.msra.mxu0 0
        %956 = vmatprep.subr.bf16.mxu0 0
        %957 = vmatpush2.bf16.msra.mxu0 0
        %958 = vmatprep.mubr.bf16.mxu0 0
        %959 = vmatmul.mubr.bf16.gmra.mxu0 %v920
        %v960 = vpop.f32.mrf.mxu0
        %v961 = vadd.f32 0.0, %v960
        %v962 = vpop.f32.mrf.mxu0
        %v963 = vpop.f32.mrf.mxu0
        %v964 = vpop.f32.mrf.mxu0
        %965 = vdwg.mxu0
        %v966 = vpack.c.bf16 %v961, %v961
        %v967 = vld [vmem:[#allocation7] sm:$0xf]
        %v968 = vld [vmem:[#allocation7 + $0x4] sm:$0xf]
        %v969 = vld [vmem:[#allocation7 + $0x8] sm:$0xf]
        %v970 = vld [vmem:[#allocation7 + $0xc] sm:$0xf]
        %v971 = vld [vmem:[#allocation7 + $0x10] sm:$0xf]
        %v972 = vld [vmem:[#allocation7 + $0x14] sm:$0xf]
        %v973 = vld [vmem:[#allocation7 + $0x18] sm:$0xf]
        %v974 = vld [vmem:[#allocation7 + $0x1c] sm:$0xf]
        %v975 = vld [vmem:[#allocation7 + $0x20] sm:$0xf]
        %v976 = vld [vmem:[#allocation7 + $0x24] sm:$0xf]
        %v977 = vld [vmem:[#allocation7 + $0x28] sm:$0xf]
        %v978 = vld [vmem:[#allocation7 + $0x2c] sm:$0xf]
        %v979 = vld [vmem:[#allocation7 + $0x30] sm:$0xf]
        %v980 = vld [vmem:[#allocation7 + $0x34] sm:$0xf]
        %v981 = vld [vmem:[#allocation7 + $0x38] sm:$0xf]
        %v982 = vld [vmem:[#allocation7 + $0x3c] sm:$0xf]
        %v999 = vunpack.c.l.b16 %v967
        %v1000 = vunpack.c.l.b16 %v968
        %v1001 = vunpack.c.l.b16 %v969
        %v1002 = vunpack.c.l.b16 %v970
        %v1003 = vunpack.c.l.b16 %v971
        %v1004 = vunpack.c.l.b16 %v972
        %v1005 = vunpack.c.l.b16 %v973
        %v1006 = vunpack.c.l.b16 %v974
        %v1007 = vunpack.c.l.b16 %v975
        %v1008 = vunpack.c.l.b16 %v976
        %v1009 = vunpack.c.l.b16 %v977
        %v1010 = vunpack.c.l.b16 %v978
        %v1011 = vunpack.c.l.b16 %v979
        %v1012 = vunpack.c.l.b16 %v980
        %v1013 = vunpack.c.l.b16 %v981
        %v1014 = vunpack.c.l.b16 %v982
        %v1015 = vpack.c.b16 %v1000, %v999
        %v1016 = vpack.c.b16 %v1002, %v1001
        %v1017 = vpack.c.b16 %v1004, %v1003
        %v1018 = vpack.c.b16 %v1006, %v1005
        %v1019 = vpack.c.b16 %v1008, %v1007
        %v1020 = vpack.c.b16 %v1010, %v1009
        %v1021 = vpack.c.b16 %v1012, %v1011
        %v1022 = vpack.c.b16 %v1014, %v1013
        %1031 = vmatprep.subr.bf16.mxu0 0
        %1032 = vmatpush1.bf16.msra.mxu0 %v1022
        %1033 = vmatprep.subr.bf16.mxu0 0
        %1034 = vmatpush1.bf16.msra.mxu0 %v1021
        %1035 = vmatprep.subr.bf16.mxu0 0
        %1036 = vmatpush1.bf16.msra.mxu0 %v1020
        %1037 = vmatprep.subr.bf16.mxu0 0
        %1038 = vmatpush1.bf16.msra.mxu0 %v1019
        %1039 = vmatprep.subr.bf16.mxu0 0
        %1040 = vmatpush1.bf16.msra.mxu0 %v1018
        %1041 = vmatprep.subr.bf16.mxu0 0
        %1042 = vmatpush1.bf16.msra.mxu0 %v1017
        %1043 = vmatprep.subr.bf16.mxu0 0
        %1044 = vmatpush1.bf16.msra.mxu0 %v1016
        %1045 = vmatprep.subr.bf16.mxu0 0
        %1046 = vmatpush1.bf16.msra.mxu0 %v1015
        %1047 = vmatprep.subr.bf16.mxu0 0
        %1048 = vmatpush2.bf16.msra.mxu0 0
        %1049 = vmatprep.subr.bf16.mxu0 0
        %1050 = vmatpush2.bf16.msra.mxu0 0
        %1051 = vmatprep.subr.bf16.mxu0 0
        %1052 = vmatpush2.bf16.msra.mxu0 0
        %1053 = vmatprep.subr.bf16.mxu0 0
        %1054 = vmatpush2.bf16.msra.mxu0 0
        %1055 = vmatprep.subr.bf16.mxu0 0
        %1056 = vmatpush2.bf16.msra.mxu0 0
        %1057 = vmatprep.subr.bf16.mxu0 0
        %1058 = vmatpush2.bf16.msra.mxu0 0
        %1059 = vmatprep.subr.bf16.mxu0 0
        %1060 = vmatpush2.bf16.msra.mxu0 0
        %1061 = vmatprep.subr.bf16.mxu0 0
        %1062 = vmatpush2.bf16.msra.mxu0 0
        %1063 = vmatprep.mubr.bf16.mxu0 0
        %1064 = vmatmul.mubr.bf16.gmra.mxu0 %v966
        %v1065 = vpop.f32.mrf.mxu0
        %v1066 = vadd.f32 0.0, %v1065
        %v1067 = vpop.f32.mrf.mxu0
        %v1068 = vpop.f32.mrf.mxu0
        %v1069 = vpop.f32.mrf.mxu0
        %1070 = vdwg.mxu0
        %v1071 = vadd.f32 %v539, %v1066
        %1072 = vadd.xlane.f32.xlu0 %v1071
        %v1073 = vpop.xlane.xlu0 %1072
        %v1074 = vrcp.pop 128.0
        %v1075 = vmul.f32 %v1073, %v1074
        %v1076 = vsub.f32 %v1071, %v1075
        %v1077 = vmul.f32 %v1076, %v1076
        %1078 = vadd.xlane.f32.xlu0 %v1077
        %v1079 = vpop.xlane.xlu0 %1078
        %v1080 = vmul.f32 %v1079, %v1074
        %v1081 = vadd.f32 %v1080, 1e-05
        %v1082 = vrsqrt.pop %v1081
        %v1083 = vmul.f32 %v1076, %v1082
        %v1084 = vpack.c.bf16 %v1083, %v1083
        %v1085 = vld [vmem:[%s7] sm:$0xff]
        %v1086 = vld [vmem:[%s7 + $0x8] sm:$0xff]
        %v1087 = vld [vmem:[%s7 + $0x10] sm:$0xff]
        %v1088 = vld [vmem:[%s7 + $0x18] sm:$0xff]
        %v1089 = vld [vmem:[%s7 + $0x20] sm:$0xff]
        %v1090 = vld [vmem:[%s7 + $0x28] sm:$0xff]
        %v1091 = vld [vmem:[%s7 + $0x30] sm:$0xff]
        %v1092 = vld [vmem:[%s7 + $0x38] sm:$0xff]
        %v1093 = vld [vmem:[%s7 + $0x40] sm:$0xff]
        %v1094 = vld [vmem:[%s7 + $0x48] sm:$0xff]
        %v1095 = vld [vmem:[%s7 + $0x50] sm:$0xff]
        %v1096 = vld [vmem:[%s7 + $0x58] sm:$0xff]
        %v1097 = vld [vmem:[%s7 + $0x60] sm:$0xff]
        %v1098 = vld [vmem:[%s7 + $0x68] sm:$0xff]
        %v1099 = vld [vmem:[%s7 + $0x70] sm:$0xff]
        %v1100 = vld [vmem:[%s7 + $0x78] sm:$0xff]
        %v1117 = vunpack.c.l.b16 %v1085
        %v1118 = vunpack.c.h.b16 %v1085
        %v1119 = vunpack.c.l.b16 %v1086
        %v1120 = vunpack.c.h.b16 %v1086
        %v1121 = vunpack.c.l.b16 %v1087
        %v1122 = vunpack.c.h.b16 %v1087
        %v1123 = vunpack.c.l.b16 %v1088
        %v1124 = vunpack.c.h.b16 %v1088
        %v1125 = vunpack.c.l.b16 %v1089
        %v1126 = vunpack.c.h.b16 %v1089
        %v1127 = vunpack.c.l.b16 %v1090
        %v1128 = vunpack.c.h.b16 %v1090
        %v1129 = vunpack.c.l.b16 %v1091
        %v1130 = vunpack.c.h.b16 %v1091
        %v1131 = vunpack.c.l.b16 %v1092
        %v1132 = vunpack.c.h.b16 %v1092
        %v1133 = vunpack.c.l.b16 %v1093
        %v1134 = vunpack.c.h.b16 %v1093
        %v1135 = vunpack.c.l.b16 %v1094
        %v1136 = vunpack.c.h.b16 %v1094
        %v1137 = vunpack.c.l.b16 %v1095
        %v1138 = vunpack.c.h.b16 %v1095
        %v1139 = vunpack.c.l.b16 %v1096
        %v1140 = vunpack.c.h.b16 %v1096
        %v1141 = vunpack.c.l.b16 %v1097
        %v1142 = vunpack.c.h.b16 %v1097
        %v1143 = vunpack.c.l.b16 %v1098
        %v1144 = vunpack.c.h.b16 %v1098
        %v1145 = vunpack.c.l.b16 %v1099
        %v1146 = vunpack.c.h.b16 %v1099
        %v1147 = vunpack.c.l.b16 %v1100
        %v1148 = vunpack.c.h.b16 %v1100
        %v1149 = vpack.c.b16 %v1119, %v1117
        %v1150 = vpack.c.b16 %v1120, %v1118
        %v1151 = vpack.c.b16 %v1123, %v1121
        %v1152 = vpack.c.b16 %v1124, %v1122
        %v1153 = vpack.c.b16 %v1127, %v1125
        %v1154 = vpack.c.b16 %v1128, %v1126
        %v1155 = vpack.c.b16 %v1131, %v1129
        %v1156 = vpack.c.b16 %v1132, %v1130
        %v1157 = vpack.c.b16 %v1135, %v1133
        %v1158 = vpack.c.b16 %v1136, %v1134
        %v1159 = vpack.c.b16 %v1139, %v1137
        %v1160 = vpack.c.b16 %v1140, %v1138
        %v1161 = vpack.c.b16 %v1143, %v1141
        %v1162 = vpack.c.b16 %v1144, %v1142
        %v1163 = vpack.c.b16 %v1147, %v1145
        %v1164 = vpack.c.b16 %v1148, %v1146
        %1181 = vmatprep.subr.bf16.mxu0 %v1164
        %1182 = vmatpush1.bf16.msra.mxu0 %v1163
        %1183 = vmatprep.subr.bf16.mxu0 %v1162
        %1184 = vmatpush1.bf16.msra.mxu0 %v1161
        %1185 = vmatprep.subr.bf16.mxu0 %v1160
        %1186 = vmatpush1.bf16.msra.mxu0 %v1159
        %1187 = vmatprep.subr.bf16.mxu0 %v1158
        %1188 = vmatpush1.bf16.msra.mxu0 %v1157
        %1189 = vmatprep.subr.bf16.mxu0 %v1156
        %1190 = vmatpush1.bf16.msra.mxu0 %v1155
        %1191 = vmatprep.subr.bf16.mxu0 %v1154
        %1192 = vmatpush1.bf16.msra.mxu0 %v1153
        %1193 = vmatprep.subr.bf16.mxu0 %v1152
        %1194 = vmatpush1.bf16.msra.mxu0 %v1151
        %1195 = vmatprep.subr.bf16.mxu0 %v1150
        %1196 = vmatpush1.bf16.msra.mxu0 %v1149
        %1197 = vmatprep.subr.bf16.mxu0 0
        %1198 = vmatpush2.bf16.msra.mxu0 0
        %1199 = vmatprep.subr.bf16.mxu0 0
        %1200 = vmatpush2.bf16.msra.mxu0 0
        %1201 = vmatprep.subr.bf16.mxu0 0
        %1202 = vmatpush2.bf16.msra.mxu0 0
        %1203 = vmatprep.subr.bf16.mxu0 0
        %1204 = vmatpush2.bf16.msra.mxu0 0
        %1205 = vmatprep.subr.bf16.mxu0 0
        %1206 = vmatpush2.bf16.msra.mxu0 0
        %1207 = vmatprep.subr.bf16.mxu0 0
        %1208 = vmatpush2.bf16.msra.mxu0 0
        %1209 = vmatprep.subr.bf16.mxu0 0
        %1210 = vmatpush2.bf16.msra.mxu0 0
        %1211 = vmatprep.subr.bf16.mxu0 0
        %1212 = vmatpush2.bf16.msra.mxu0 0
        %1213 = vmatprep.mubr.bf16.mxu0 0
        %1214 = vmatmul.mubr.bf16.gmra.mxu0 %v1084
        %v1215 = vpop.f32.mrf.mxu0
        %v1216 = vadd.f32 0.0, %v1215
        %v1217 = vpop.f32.mrf.mxu0
        %v1218 = vadd.f32 0.0, %v1217
        %v1219 = vpop.f32.mrf.mxu0
        %v1220 = vpop.f32.mrf.mxu0
        %1221 = vdwg.mxu0
        %v1222 = vmax.f32 %v1216, 0.0
        %v1223 = vmax.f32 %v1218, 0.0
        %v1224 = vpack.c.bf16 %v1222, %v1222
        %v1225 = vpack.c.bf16 %v1223, %v1223
        %v1226 = vld [vmem:[#allocation9] sm:$0xf]
        %v1227 = vld [vmem:[#allocation9 + $0x4] sm:$0xf]
        %v1228 = vld [vmem:[#allocation9 + $0x8] sm:$0xf]
        %v1229 = vld [vmem:[#allocation9 + $0xc] sm:$0xf]
        %v1230 = vld [vmem:[#allocation9 + $0x10] sm:$0xf]
        %v1231 = vld [vmem:[#allocation9 + $0x14] sm:$0xf]
        %v1232 = vld [vmem:[#allocation9 + $0x18] sm:$0xf]
        %v1233 = vld [vmem:[#allocation9 + $0x1c] sm:$0xf]
        %v1234 = vld [vmem:[#allocation9 + $0x20] sm:$0xf]
        %v1235 = vld [vmem:[#allocation9 + $0x24] sm:$0xf]
        %v1236 = vld [vmem:[#allocation9 + $0x28] sm:$0xf]
        %v1237 = vld [vmem:[#allocation9 + $0x2c] sm:$0xf]
        %v1238 = vld [vmem:[#allocation9 + $0x30] sm:$0xf]
        %v1239 = vld [vmem:[#allocation9 + $0x34] sm:$0xf]
        %v1240 = vld [vmem:[#allocation9 + $0x38] sm:$0xf]
        %v1241 = vld [vmem:[#allocation9 + $0x3c] sm:$0xf]
        %v1242 = vld [vmem:[#allocation9 + $0x40] sm:$0xf]
        %v1243 = vld [vmem:[#allocation9 + $0x44] sm:$0xf]
        %v1244 = vld [vmem:[#allocation9 + $0x48] sm:$0xf]
        %v1245 = vld [vmem:[#allocation9 + $0x4c] sm:$0xf]
        %v1246 = vld [vmem:[#allocation9 + $0x50] sm:$0xf]
        %v1247 = vld [vmem:[#allocation9 + $0x54] sm:$0xf]
        %v1248 = vld [vmem:[#allocation9 + $0x58] sm:$0xf]
        %v1249 = vld [vmem:[#allocation9 + $0x5c] sm:$0xf]
        %v1250 = vld [vmem:[#allocation9 + $0x60] sm:$0xf]
        %v1251 = vld [vmem:[#allocation9 + $0x64] sm:$0xf]
        %v1252 = vld [vmem:[#allocation9 + $0x68] sm:$0xf]
        %v1253 = vld [vmem:[#allocation9 + $0x6c] sm:$0xf]
        %v1254 = vld [vmem:[#allocation9 + $0x70] sm:$0xf]
        %v1255 = vld [vmem:[#allocation9 + $0x74] sm:$0xf]
        %v1256 = vld [vmem:[#allocation9 + $0x78] sm:$0xf]
        %v1257 = vld [vmem:[#allocation9 + $0x7c] sm:$0xf]
        %v1290 = vunpack.c.l.b16 %v1226
        %v1291 = vunpack.c.l.b16 %v1227
        %v1292 = vunpack.c.l.b16 %v1228
        %v1293 = vunpack.c.l.b16 %v1229
        %v1294 = vunpack.c.l.b16 %v1230
        %v1295 = vunpack.c.l.b16 %v1231
        %v1296 = vunpack.c.l.b16 %v1232
        %v1297 = vunpack.c.l.b16 %v1233
        %v1298 = vunpack.c.l.b16 %v1234
        %v1299 = vunpack.c.l.b16 %v1235
        %v1300 = vunpack.c.l.b16 %v1236
        %v1301 = vunpack.c.l.b16 %v1237
        %v1302 = vunpack.c.l.b16 %v1238
        %v1303 = vunpack.c.l.b16 %v1239
        %v1304 = vunpack.c.l.b16 %v1240
        %v1305 = vunpack.c.l.b16 %v1241
        %v1306 = vunpack.c.l.b16 %v1242
        %v1307 = vunpack.c.l.b16 %v1243
        %v1308 = vunpack.c.l.b16 %v1244
        %v1309 = vunpack.c.l.b16 %v1245
        %v1310 = vunpack.c.l.b16 %v1246
        %v1311 = vunpack.c.l.b16 %v1247
        %v1312 = vunpack.c.l.b16 %v1248
        %v1313 = vunpack.c.l.b16 %v1249
        %v1314 = vunpack.c.l.b16 %v1250
        %v1315 = vunpack.c.l.b16 %v1251
        %v1316 = vunpack.c.l.b16 %v1252
        %v1317 = vunpack.c.l.b16 %v1253
        %v1318 = vunpack.c.l.b16 %v1254
        %v1319 = vunpack.c.l.b16 %v1255
        %v1320 = vunpack.c.l.b16 %v1256
        %v1321 = vunpack.c.l.b16 %v1257
        %v1322 = vpack.c.b16 %v1291, %v1290
        %v1323 = vpack.c.b16 %v1293, %v1292
        %v1324 = vpack.c.b16 %v1295, %v1294
        %v1325 = vpack.c.b16 %v1297, %v1296
        %v1326 = vpack.c.b16 %v1299, %v1298
        %v1327 = vpack.c.b16 %v1301, %v1300
        %v1328 = vpack.c.b16 %v1303, %v1302
        %v1329 = vpack.c.b16 %v1305, %v1304
        %v1330 = vpack.c.b16 %v1307, %v1306
        %v1331 = vpack.c.b16 %v1309, %v1308
        %v1332 = vpack.c.b16 %v1311, %v1310
        %v1333 = vpack.c.b16 %v1313, %v1312
        %v1334 = vpack.c.b16 %v1315, %v1314
        %v1335 = vpack.c.b16 %v1317, %v1316
        %v1336 = vpack.c.b16 %v1319, %v1318
        %v1337 = vpack.c.b16 %v1321, %v1320
        %1354 = vmatprep.subr.bf16.mxu0 0
        %1355 = vmatpush1.bf16.msra.mxu0 %v1329
        %1356 = vmatprep.subr.bf16.mxu0 0
        %1357 = vmatpush1.bf16.msra.mxu0 %v1328
        %1358 = vmatprep.subr.bf16.mxu0 0
        %1359 = vmatpush1.bf16.msra.mxu0 %v1327
        %1360 = vmatprep.subr.bf16.mxu0 0
        %1361 = vmatpush1.bf16.msra.mxu0 %v1326
        %1362 = vmatprep.subr.bf16.mxu0 0
        %1363 = vmatpush1.bf16.msra.mxu0 %v1325
        %1364 = vmatprep.subr.bf16.mxu0 0
        %1365 = vmatpush1.bf16.msra.mxu0 %v1324
        %1366 = vmatprep.subr.bf16.mxu0 0
        %1367 = vmatpush1.bf16.msra.mxu0 %v1323
        %1368 = vmatprep.subr.bf16.mxu0 0
        %1369 = vmatpush1.bf16.msra.mxu0 %v1322
        %1370 = vmatprep.subr.bf16.mxu0 0
        %1371 = vmatpush2.bf16.msra.mxu0 %v1337
        %1372 = vmatprep.subr.bf16.mxu0 0
        %1373 = vmatpush2.bf16.msra.mxu0 %v1336
        %1374 = vmatprep.subr.bf16.mxu0 0
        %1375 = vmatpush2.bf16.msra.mxu0 %v1335
        %1376 = vmatprep.subr.bf16.mxu0 0
        %1377 = vmatpush2.bf16.msra.mxu0 %v1334
        %1378 = vmatprep.subr.bf16.mxu0 0
        %1379 = vmatpush2.bf16.msra.mxu0 %v1333
        %1380 = vmatprep.subr.bf16.mxu0 0
        %1381 = vmatpush2.bf16.msra.mxu0 %v1332
        %1382 = vmatprep.subr.bf16.mxu0 0
        %1383 = vmatpush2.bf16.msra.mxu0 %v1331
        %1384 = vmatprep.subr.bf16.mxu0 0
        %1385 = vmatpush2.bf16.msra.mxu0 %v1330
        %1386 = vmatprep.mubr.bf16.mxu0 %v1225
        %1387 = vmatmul.mubr.bf16.gmra.mxu0 %v1224
        %v1388 = vpop.f32.mrf.mxu0
        %v1389 = vadd.f32 0.0, %v1388
        %v1390 = vpop.f32.mrf.mxu0
        %v1391 = vpop.f32.mrf.mxu0
        %v1392 = vpop.f32.mrf.mxu0
        %1393 = vdwg.mxu0
        %v1394 = vadd.f32 %v1083, %v1389
        %1395 = vadd.xlane.f32.xlu0 %v1394
        %v1396 = vpop.xlane.xlu0 %1395
        %v1397 = vmul.f32 %v1396, %v1074
        %v1398 = vsub.f32 %v1394, %v1397
        %v1399 = vmul.f32 %v1398, %v1398
        %1400 = vadd.xlane.f32.xlu0 %v1399
        %v1401 = vpop.xlane.xlu0 %1400
        %v1402 = vmul.f32 %v1401, %v1074
        %v1403 = vadd.f32 %v1402, 1e-05
        %v1404 = vrsqrt.pop %v1403
        %v1405 = vmul.f32 %v1398, %v1404
        %v1406 = vpack.c.bf16 %v1405, %v1405
        %v1407 = vld [vmem:[#allocation10] sm:$0xf]
        %v1408 = vld [vmem:[#allocation10 + $0x4] sm:$0xf]
        %v1409 = vld [vmem:[#allocation10 + $0x8] sm:$0xf]
        %v1410 = vld [vmem:[#allocation10 + $0xc] sm:$0xf]
        %v1411 = vld [vmem:[#allocation10 + $0x10] sm:$0xf]
        %v1412 = vld [vmem:[#allocation10 + $0x14] sm:$0xf]
        %v1413 = vld [vmem:[#allocation10 + $0x18] sm:$0xf]
        %v1414 = vld [vmem:[#allocation10 + $0x1c] sm:$0xf]
        %v1415 = vld [vmem:[#allocation10 + $0x20] sm:$0xf]
        %v1416 = vld [vmem:[#allocation10 + $0x24] sm:$0xf]
        %v1417 = vld [vmem:[#allocation10 + $0x28] sm:$0xf]
        %v1418 = vld [vmem:[#allocation10 + $0x2c] sm:$0xf]
        %v1419 = vld [vmem:[#allocation10 + $0x30] sm:$0xf]
        %v1420 = vld [vmem:[#allocation10 + $0x34] sm:$0xf]
        %v1421 = vld [vmem:[#allocation10 + $0x38] sm:$0xf]
        %v1422 = vld [vmem:[#allocation10 + $0x3c] sm:$0xf]
        %v1423 = vld [vmem:[%s10] sm:$0x1]
        %v1425 = vlaneseq
        %v1426 = vshrl.u32 %v1425, 7
        %v1427 = vsub.s32 0, %v1426
        %v1428 = vrot.slane %v1423, %v1427
        %v1446 = vunpack.c.l.b16 %v1407
        %v1447 = vunpack.c.l.b16 %v1408
        %v1448 = vunpack.c.l.b16 %v1409
        %v1449 = vunpack.c.l.b16 %v1410
        %v1450 = vunpack.c.l.b16 %v1411
        %v1451 = vunpack.c.l.b16 %v1412
        %v1452 = vunpack.c.l.b16 %v1413
        %v1453 = vunpack.c.l.b16 %v1414
        %v1454 = vunpack.c.l.b16 %v1415
        %v1455 = vunpack.c.l.b16 %v1416
        %v1456 = vunpack.c.l.b16 %v1417
        %v1457 = vunpack.c.l.b16 %v1418
        %v1458 = vunpack.c.l.b16 %v1419
        %v1459 = vunpack.c.l.b16 %v1420
        %v1460 = vunpack.c.l.b16 %v1421
        %v1461 = vunpack.c.l.b16 %v1422
        %v1462 = vpack.c.b16 %v1447, %v1446
        %v1463 = vpack.c.b16 %v1449, %v1448
        %v1464 = vpack.c.b16 %v1451, %v1450
        %v1465 = vpack.c.b16 %v1453, %v1452
        %v1466 = vpack.c.b16 %v1455, %v1454
        %v1467 = vpack.c.b16 %v1457, %v1456
        %v1468 = vpack.c.b16 %v1459, %v1458
        %v1469 = vpack.c.b16 %v1461, %v1460
        %1478 = vmatprep.subr.bf16.mxu0 0
        %1479 = vmatpush1.bf16.msra.mxu0 %v1469
        %1480 = vmatprep.subr.bf16.mxu0 0
        %1481 = vmatpush1.bf16.msra.mxu0 %v1468
        %1482 = vmatprep.subr.bf16.mxu0 0
        %1483 = vmatpush1.bf16.msra.mxu0 %v1467
        %1484 = vmatprep.subr.bf16.mxu0 0
        %1485 = vmatpush1.bf16.msra.mxu0 %v1466
        %1486 = vmatprep.subr.bf16.mxu0 0
        %1487 = vmatpush1.bf16.msra.mxu0 %v1465
        %1488 = vmatprep.subr.bf16.mxu0 0
        %1489 = vmatpush1.bf16.msra.mxu0 %v1464
        %1490 = vmatprep.subr.bf16.mxu0 0
        %1491 = vmatpush1.bf16.msra.mxu0 %v1463
        %1492 = vmatprep.subr.bf16.mxu0 0
        %1493 = vmatpush1.bf16.msra.mxu0 %v1462
        %1494 = vmatprep.subr.bf16.mxu0 0
        %1495 = vmatpush2.bf16.msra.mxu0 0
        %1496 = vmatprep.subr.bf16.mxu0 0
        %1497 = vmatpush2.bf16.msra.mxu0 0
        %1498 = vmatprep.subr.bf16.mxu0 0
        %1499 = vmatpush2.bf16.msra.mxu0 0
        %1500 = vmatprep.subr.bf16.mxu0 0
        %1501 = vmatpush2.bf16.msra.mxu0 0
        %1502 = vmatprep.subr.bf16.mxu0 0
        %1503 = vmatpush2.bf16.msra.mxu0 0
        %1504 = vmatprep.subr.bf16.mxu0 0
        %1505 = vmatpush2.bf16.msra.mxu0 0
        %1506 = vmatprep.subr.bf16.mxu0 0
        %1507 = vmatpush2.bf16.msra.mxu0 0
        %1508 = vmatprep.subr.bf16.mxu0 0
        %1509 = vmatpush2.bf16.msra.mxu0 0
        %1510 = vmatprep.mubr.bf16.mxu0 0
        %1511 = vmatmul.mubr.bf16.gmra.mxu0 %v1406
        %v1512 = vpop.f32.mrf.mxu0
        %v1513 = vadd.f32 %v1428, %v1512
        %v1514 = vpop.f32.mrf.mxu0
        %v1515 = vpop.f32.mrf.mxu0
        %v1516 = vpop.f32.mrf.mxu0
        %1517 = vdwg.mxu0
        %1518 = vst [vmem:[%s533] sm:$0xff] %v1513
        %v1519 = vlaneseq
        %v1520 = vand.u32 %v1519, 127
        %vm1521 = vcmp.lt.s32.totalorder %v1520, 4
        %v1522 = vsel %vm1521, %v1513, -1e+30
        %1523 = vmax.xlane.f32.xlu0 %v1522
        %v1524 = vpop.xlane.xlu0 %1523
        %v1525 = vsub.f32 %v1522, %v1524
        %v1526 = vmul.f32 %v1525, 1.442695
        %v1527 = vpow.pop %v1526
        %1528 = vadd.xlane.f32.xlu0 %v1527
        %v1529 = vpop.xlane.xlu0 %1528
        %v1530 = vlog2.pop %v1529
        %v1531 = vmul.f32 %v1530, 0.6931472
        %v1532 = vadd.f32 %v1524, %v1531
        %1533 = vset.pattern.permute.xlu0 0
        %1534 = vperm.xlu0 %1533, %v541
        %v1535 = vpop.permute.xlu0 %1534
        %vm1536 = vcmp.eq.s32.totalorder %v1520, %v1535
        %v1537 = vsel %vm1536, 1, 0
        %v1538 = vcvt.s32.f32 %v1537
        %v1539 = vmul.f32 %v1513, %v1538
        %1540 = vadd.xlane.f32.xlu0 %v1539
        %v1541 = vpop.xlane.xlu0 %1540
        %vm1542 = vcmp.ne.s32.totalorder %v541, 4294967196
        %v1543 = vsel %vm1542, 1, 0
        %v1544 = vcvt.s32.f32 %v1543
        %v1545 = vsub.f32 %v1532, %v1541
        %v1546 = vmul.f32 %v1545, %v1544
        %vm1547 = vcmask 7168
        %v1548 = vsel %vm1547, %v1546, 0.0
        %1549 = vadd.xlane.f32.xlu0 %v1548
        %v1550 = vpop.xlane.xlu0 %1549
        %v1551 = vrot.slane %v1550, 4
        %v1552 = vadd.f32 %v1550, %v1551
        %v1553 = vrot.slane %v1552, 2
        %v1554 = vadd.f32 %v1552, %v1553
        %v1555 = vrot.slane %v1554, 1
        %v1556 = vadd.f32 %v1554, %v1555
        %s1557 = vtos %v1556
        %v1558 = vsel %vm1547, %v1544, 0.0
        %1559 = vadd.xlane.f32.xlu0 %v1558
        %v1560 = vpop.xlane.xlu0 %1559
        %v1561 = vrot.slane %v1560, 4
        %v1562 = vadd.f32 %v1560, %v1561
        %v1563 = vrot.slane %v1562, 2
        %v1564 = vadd.f32 %v1562, %v1563
        %v1565 = vrot.slane %v1564, 1
        %v1566 = vadd.f32 %v1564, %v1565
        %s1567 = vtos %v1566
        %vm1568 = vcmp.eq.s32.totalorder %v1520, 0
        %vm1569 = vcmp.eq.s32.totalorder %v1520, 1
        %v1570 = vstv %s1567
        %v1571 = vsel %vm1569, %v1570, 0.0
        %v1572 = vstv %s1557
        %v1573 = vsel %vm1568, %v1572, %v1571
        %1574 = vst [vmem:[%s536] sm:$0x1] %v1573
        %p1575 = scmp.lt.s32.totalorder %s28, 1
        %s1576 = scalar_select %p1575, %s28, 1
        %s1577 = smul.addr %s1576, 8
        %s1578 = scalar_lea.vmem %s11, %s1577
        %p1579 = scmp.lt.s32.totalorder %s28, 1
        %s1580 = scalar_select %p1579, %s28, 1
        %s1581 = scalar_lea.vmem %s12, %s1580
        // Predicated region
        $region89: #{xlnet_classifier_forward.1} parent=63 // pred_check
          %p1582 = pneg %p292
        $region90: #{xlnet_classifier_forward.1} parent=63 // pred_check_branch
          %1584 = sbr.rel (%p1582) target = $region92
        $region91: #{xlnet_classifier_forward.1} parent=63 // pred_region
          _
        $region92: #{xlnet_classifier_forward.1} parent=63 // pred_fallthru
          _
        // Predicated region
        $region93: #{xlnet_classifier_forward.1} parent=63 // pred_check
          %p1585 = pneg %p318
        $region94: #{xlnet_classifier_forward.1} parent=63 // pred_check_branch
          %1587 = sbr.rel (%p1585) target = $region96
        $region95: #{xlnet_classifier_forward.1} parent=63 // pred_region
          _
        $region96: #{xlnet_classifier_forward.1} parent=63 // pred_fallthru
          _
      $region64: #{xlnet_classifier_forward.1} parent=5 // pred_fallthru
        _
      %p1588 = scmp.le.s32.totalorder 2, %s23
      // Predicated region
      $region97: #{xlnet_classifier_forward.1} parent=5 // pred_check
        %p1589 = pneg %p1588
      $region98: #{xlnet_classifier_forward.1} parent=5 // pred_check_branch
        %1591 = sbr.rel (%p1589) target = $region100
      $region99: #{xlnet_classifier_forward.1} parent=5 // pred_region
        %s1592 = ssub.s32 %s23, 2
        // Predicated region
        $region101: #{xlnet_classifier_forward.1} parent=99 // pred_check
          %p1593 = pneg %p298
        $region102: #{xlnet_classifier_forward.1} parent=99 // pred_check_branch
          %1595 = sbr.rel (%p1593) target = $region104
        $region103: #{xlnet_classifier_forward.1} parent=99 // pred_region
          %p1596 = scmp.lt.s32.totalorder %s29, 1
          %s1597 = scalar_select %p1596, %s29, 1
          %s1598 = smul.addr %s1597, 8
          %s1599 = scalar_lea.vmem %s11, %s1598
        $region104: #{xlnet_classifier_forward.1} parent=99 // pred_fallthru
          _
        // Predicated region
        $region105: #{xlnet_classifier_forward.1} parent=99 // pred_check
          %p1600 = pneg %p324
        $region106: #{xlnet_classifier_forward.1} parent=99 // pred_check_branch
          %1602 = sbr.rel (%p1600) target = $region108
        $region107: #{xlnet_classifier_forward.1} parent=99 // pred_region
          %p1603 = scmp.lt.s32.totalorder %s29, 1
          %s1604 = scalar_select %p1603, %s29, 1
          %s1605 = scalar_lea.vmem %s12, %s1604
        $region108: #{xlnet_classifier_forward.1} parent=99 // pred_fallthru
          _
      $region100: #{xlnet_classifier_forward.1} parent=5 // pred_fallthru
        _
    $region6: #{xlnet_classifier_forward.1} parent=1 // loop_footer
      %s27 = sadd.s32 1, %s23
    $region7: #{xlnet_classifier_forward.1} parent=1 // loop_footer_branch
      %22 = sbr.rel target = $region3
    $region8: #{xlnet_classifier_forward.1} parent=1 // loop_exit
      _
    %1606 = vsyncpa [#allocation3], 1
    %s1607 = scalar_lea.sflag [#allocation3], 1
    %1608 = vsyncpa %s1607, 1
    %1609 = vsyncpa [#allocation5], 1
    %1610 = vsyncpa [#allocation8], 1
    %1611 = vsyncpa [#allocation11], 1

</llo_original>
